<compile_context>
chip_gen: v5e
topology: v5e:2x2
jax: 0.10.0
libtpu: 0.0.40
codegen_flags: <defaults>
</compile_context>

<pallas_src>
import jax
import jax.numpy as jnp
from jax import lax
from jax.experimental import pallas as pl
from jax.experimental.pallas import tpu as pltpu

_HEAD_ROWS = 8  # sublane-padded transposed head width (row 0 is the real output)


# ------------------------------ fused kernel --------------------------------

def _fused_gcn_kernel(
    c0_ref, v0_ref,                  # (m, emb) f32, (n, emb) f32 embedded features
    a_cv_ref, a_vc_ref,              # (m, n) bf16, (n, m) bf16 UNnormalized adjacency
    c_ref, b_ref,                    # (n, 1) f32, (m, 1) f32
    c2v_w1_ref, c2v_b1_ref, c2v_w2_ref, c2v_b2_ref,   # [L,emb,emb] bf16 / [L,1,emb] f32
    v2c_w1_ref, v2c_b1_ref, v2c_w2_ref, v2c_b2_ref,
    h1_w1_ref, h1_b1_ref, h1_w2t_ref,                 # (emb,emb) bf16, (1,emb) f32, (8,emb) bf16
    h2_w1_ref, h2_b1_ref, h2_w2t_ref,
    t_c2v_ref, t_v2c_ref, inv_total_ref,              # SMEM: (L,), (L,), (1,) f32
    out1_ref, out2_ref,              # (8, n) f32, (8, m) f32
):
    C = c0_ref[...]                  # (m, emb) f32
    V = v0_ref[...]                  # (n, emb) f32
    A_cv = a_cv_ref[...]             # (m, n)  bf16  adj_left_from_right (unnormalized)
    A_vc = a_vc_ref[...]             # (n, m)  bf16  adj_right_from_left (unnormalized)
    inv_total = inv_total_ref[0]     # f32 scalar: 1 / clamp(sum(edge_weight), 1)

    m, emb = C.shape
    n = V.shape[0]
    # Hoisted broadcasts (JAX does not CSE broadcast_in_dim across the unroll).
    cvec = jnp.broadcast_to(c_ref[...], (n, emb))
    bvec = jnp.broadcast_to(b_ref[...], (m, emb))

    def bf16(x):
        return x.astype(jnp.bfloat16)

    n_layers = c2v_w1_ref.shape[0]
    # Static unroll: L is small and everything stays in VMEM/vregs (LLO-visible).
    for i in range(n_layers):
        V_k = V
        # ---- conv_c_to_v (right_to_left=False), fused with the outer ReLU ----
        conv = jnp.dot(A_vc, bf16(C), preferred_element_type=jnp.float32) * inv_total
        h = V_k + t_c2v_ref[i] * (cvec - conv)
        h = jnp.maximum(
            jnp.dot(bf16(h), c2v_w1_ref[i], preferred_element_type=jnp.float32)
            + c2v_b1_ref[i], 0.0)
        V = jnp.maximum(
            jnp.dot(bf16(h), c2v_w2_ref[i], preferred_element_type=jnp.float32)
            + c2v_b2_ref[i], 0.0)
        # ---- conv_v_to_c (right_to_left=True), fused with the outer ReLU -----
        conv = jnp.dot(A_cv, bf16(2.0 * V - V_k),
                       preferred_element_type=jnp.float32) * inv_total
        h = C - t_v2c_ref[i] * (bvec - conv)
        h = jnp.maximum(
            jnp.dot(bf16(h), v2c_w1_ref[i], preferred_element_type=jnp.float32)
            + v2c_b1_ref[i], 0.0)
        C = jnp.maximum(
            jnp.dot(bf16(h), v2c_w2_ref[i], preferred_element_type=jnp.float32)
            + v2c_b2_ref[i], 0.0)

    # Heads: Linear(emb,emb)+b -> ReLU -> Linear(emb,1 no bias).
    # Transposed, lane-dense epilogue: contract emb of (8,emb) W2t with emb of
    # (nodes,emb) activations -> (8, nodes); only row 0 is meaningful.
    hv = jnp.maximum(
        jnp.dot(bf16(V), h1_w1_ref[...], preferred_element_type=jnp.float32)
        + h1_b1_ref[...], 0.0)
    out1_ref[...] = lax.dot_general(
        h1_w2t_ref[...], bf16(hv),
        dimension_numbers=(((1,), (1,)), ((), ())),
        preferred_element_type=jnp.float32)
    hc = jnp.maximum(
        jnp.dot(bf16(C), h2_w1_ref[...], preferred_element_type=jnp.float32)
        + h2_b1_ref[...], 0.0)
    out2_ref[...] = lax.dot_general(
        h2_w2t_ref[...], bf16(hc),
        dimension_numbers=(((1,), (1,)), ((), ())),
        preferred_element_type=jnp.float32)


# ------------------------------- glue / params ------------------------------

def _vmem_limit_bytes():
    """Per-generation VMEM budget: physical capacity minus compiler headroom."""
    try:
        cap = int(pltpu.get_tpu_info().vmem_capacity_bytes)
        return max(cap - 24 * 1024 * 1024, 32 * 1024 * 1024)
    except Exception:  # pragma: no cover - conservative fallback
        return 48 * 1024 * 1024


def init_params(key, emb, n_cons_f, n_var_f, n_layers):
    keys = iter(jax.random.split(key, 32))

    def lin_w(fan_in, fan_out, prefix=(), dtype=jnp.float32):
        w = (jax.random.normal(next(keys), prefix + (fan_in, fan_out), jnp.float32)
             / jnp.sqrt(fan_in))
        return w.astype(dtype)

    def lin_b(fan_out, prefix=()):
        return jax.random.normal(next(keys), prefix + (1, fan_out), jnp.float32) * 0.01

    L = n_layers
    bf = jnp.bfloat16
    return {
        # Embedding layers run in the XLA wrapper (K = 4/6 is MXU-hostile) -> f32.
        "cons_emb_w": lin_w(n_cons_f, emb), "cons_emb_b": lin_b(emb),
        "var_emb_w": lin_w(n_var_f, emb),   "var_emb_b": lin_b(emb),
        # Stacked per-layer conv weights: [L, emb, emb] bf16 / [L, 1, emb] f32.
        "c2v_w1": lin_w(emb, emb, (L,), bf), "c2v_b1": lin_b(emb, (L,)),
        "c2v_w2": lin_w(emb, emb, (L,), bf), "c2v_b2": lin_b(emb, (L,)),
        "c2v_temp": jnp.full((L, 2), 0.9, jnp.float32),   # temp.data.fill_(0.9)
        "v2c_w1": lin_w(emb, emb, (L,), bf), "v2c_b1": lin_b(emb, (L,)),
        "v2c_w2": lin_w(emb, emb, (L,), bf), "v2c_b2": lin_b(emb, (L,)),
        "v2c_temp": jnp.full((L, 2), 0.9, jnp.float32),
        "head1_w1": lin_w(emb, emb, (), bf), "head1_b1": lin_b(emb),
        "head1_w2": lin_w(emb, 1),
        "head2_w1": lin_w(emb, emb, (), bf), "head2_b1": lin_b(emb),
        "head2_w2": lin_w(emb, 1),
    }


@jax.jit
def gcn_policy_forward(params, constraint_features, edge_indices, edge_features,
                       variable_features, c, b):
    m = b.shape[0]   # constraints (left nodes)
    n = c.shape[0]   # variables   (right nodes)
    emb = params["head1_w1"].shape[0]

    # ---- adjacency: ONE scatter-add into the min(m,n) square ----------------
    # Both reference builders use the SAME (row, col, value) triples (no
    # transpose for right_from_left), so a single scatter feeds both shapes.
    # Scatter-add reproduces coalesce(); the reference's "row" normalization is
    # a GLOBAL division by clamp(sum(values), 1) -> deferred to an f32 scalar
    # applied inside the kernel after the bf16 matmul.
    ew = edge_features                         # edge_embedding == identity
    s = min(m, n)
    sq = jnp.zeros((s, s), jnp.float32).at[edge_indices[:, 0],
                                           edge_indices[:, 1]].add(ew)
    inv_total = (1.0 / jnp.maximum(jnp.sum(ew), 1.0)).reshape(1).astype(jnp.float32)
    A_cv = jnp.pad(sq, ((0, m - s), (0, n - s))).astype(jnp.bfloat16)   # (m, n)
    A_vc = jnp.pad(sq, ((0, n - s), (0, m - s))).astype(jnp.bfloat16)   # (n, m)

    # ---- feature embeddings in plain XLA (narrow K, keeps kernel lane-dense) -
    C0 = jax.nn.relu(constraint_features @ params["cons_emb_w"] + params["cons_emb_b"])
    V0 = jax.nn.relu(variable_features @ params["var_emb_w"] + params["var_emb_b"])

    # temp indices per reference: conv_c_to_v uses temp[1], conv_v_to_c temp[0].
    t_c2v = params["c2v_temp"][:, 1]
    t_v2c = params["v2c_temp"][:, 0]

    # Transposed, sublane-padded head W2: (emb, 1) -> (8, emb), row 0 real.
    h1_w2t = (jnp.zeros((_HEAD_ROWS, emb), jnp.float32)
              .at[0, :].set(params["head1_w2"][:, 0]).astype(jnp.bfloat16))
    h2_w2t = (jnp.zeros((_HEAD_ROWS, emb), jnp.float32)
              .at[0, :].set(params["head2_w2"][:, 0]).astype(jnp.bfloat16))

    vmem = pl.BlockSpec(memory_space=pltpu.MemorySpace.VMEM)
    smem = pl.BlockSpec(memory_space=pltpu.MemorySpace.SMEM)
    in_specs = [vmem] * 20 + [smem] * 3

    out1_t, out2_t = pl.pallas_call(
        _fused_gcn_kernel,
        out_shape=(jax.ShapeDtypeStruct((_HEAD_ROWS, n), jnp.float32),
                   jax.ShapeDtypeStruct((_HEAD_ROWS, m), jnp.float32)),
        in_specs=in_specs,
        out_specs=(vmem, vmem),
        compiler_params=pltpu.CompilerParams(
            vmem_limit_bytes=_vmem_limit_bytes()),
    )(C0, V0, A_cv, A_vc, c, b,
      params["c2v_w1"], params["c2v_b1"], params["c2v_w2"], params["c2v_b2"],
      params["v2c_w1"], params["v2c_b1"], params["v2c_w2"], params["v2c_b2"],
      params["head1_w1"], params["head1_b1"], h1_w2t,
      params["head2_w1"], params["head2_b1"], h2_w2t,
      t_c2v, t_v2c, inv_total)

    # Row 0 of the transposed heads is output_module{1,2}; reshape to (nodes, 1).
    return jnp.transpose(out1_t[:1, :]), jnp.transpose(out2_t[:1, :])


# ----------------------------------- main -----------------------------------

if __name__ == "__main__":
    emb = 128        # emb_size (MXU lane width -> lane-dense tiles)
    n_cons_f = 4     # nConsF
    n_var_f = 6      # nVarF
    m = 16           # number of constraints  (b.shape[0])
    n = 24           # number of variables    (c.shape[0])
    n_edges = 40
    n_layers = 4     # covolution_num

    key = jax.random.PRNGKey(0)
    k_params, k_cons, k_var, k_ew, k_ei, k_c, k_b = jax.random.split(key, 7)

    params = init_params(k_params, emb, n_cons_f, n_var_f, n_layers)

    constraint_features = jax.random.normal(k_cons, (m, n_cons_f), jnp.float32)
    variable_features = jax.random.normal(k_var, (n, n_var_f), jnp.float32)
    # The reference uses the SAME index tensor for both adjacency orientations
    # ((m,n) and (n,m)), so indices must be < min(m, n).
    edge_indices = jax.random.randint(k_ei, (n_edges, 2), 0, min(m, n), dtype=jnp.int32)
    assert int(edge_indices.max()) < min(m, n)
    edge_features = jax.random.uniform(k_ew, (n_edges,), jnp.float32)
    c = jax.random.normal(k_c, (n, 1), jnp.float32)
    b = jax.random.normal(k_b, (m, 1), jnp.float32)

    out1, out2 = gcn_policy_forward(params, constraint_features, edge_indices,
                                    edge_features, variable_features, c, b)
    jax.block_until_ready((out1, out2))
    assert out1.shape == (n, 1) and out1.dtype == jnp.float32
    assert out2.shape == (m, 1) and out2.dtype == jnp.float32
    assert bool(jnp.all(jnp.isfinite(out1))) and bool(jnp.all(jnp.isfinite(out2)))
    print("KERNEL_OK")
</pallas_src>

<mosaic_0001>
module attributes {stable_mosaic.version = 11 : i64} {
  func.func @_fused_gcn_kernel(%arg0: memref<16x128xf32, #tpu.memory_space<vmem>>, %arg1: memref<24x128xf32, #tpu.memory_space<vmem>>, %arg2: memref<16x24xbf16, #tpu.memory_space<vmem>>, %arg3: memref<24x16xbf16, #tpu.memory_space<vmem>>, %arg4: memref<24x1xf32, #tpu.memory_space<vmem>>, %arg5: memref<16x1xf32, #tpu.memory_space<vmem>>, %arg6: memref<4x128x128xbf16, #tpu.memory_space<vmem>>, %arg7: memref<4x1x128xf32, #tpu.memory_space<vmem>>, %arg8: memref<4x128x128xbf16, #tpu.memory_space<vmem>>, %arg9: memref<4x1x128xf32, #tpu.memory_space<vmem>>, %arg10: memref<4x128x128xbf16, #tpu.memory_space<vmem>>, %arg11: memref<4x1x128xf32, #tpu.memory_space<vmem>>, %arg12: memref<4x128x128xbf16, #tpu.memory_space<vmem>>, %arg13: memref<4x1x128xf32, #tpu.memory_space<vmem>>, %arg14: memref<128x128xbf16, #tpu.memory_space<vmem>>, %arg15: memref<1x128xf32, #tpu.memory_space<vmem>>, %arg16: memref<8x128xbf16, #tpu.memory_space<vmem>>, %arg17: memref<128x128xbf16, #tpu.memory_space<vmem>>, %arg18: memref<1x128xf32, #tpu.memory_space<vmem>>, %arg19: memref<8x128xbf16, #tpu.memory_space<vmem>>, %arg20: memref<4xf32, #tpu.memory_space<smem>>, %arg21: memref<4xf32, #tpu.memory_space<smem>>, %arg22: memref<1xf32, #tpu.memory_space<smem>>, %arg23: memref<8x24xf32, #tpu.memory_space<vmem>>, %arg24: memref<8x16xf32, #tpu.memory_space<vmem>>) attributes {dimension_semantics = [], scalar_prefetch = 0 : i64, scratch_operands = 0 : i64, tpu.core_type = #tpu.core_type<tc>} {
    %c0 = arith.constant 0 : index
    %c0_0 = arith.constant 0 : index
    %0 = vector.load %arg0[%c0, %c0_0] : memref<16x128xf32, #tpu.memory_space<vmem>>, vector<16x128xf32>
    %c0_1 = arith.constant 0 : index
    %c0_2 = arith.constant 0 : index
    %1 = vector.load %arg1[%c0_1, %c0_2] : memref<24x128xf32, #tpu.memory_space<vmem>>, vector<24x128xf32>
    %c0_3 = arith.constant 0 : index
    %c0_4 = arith.constant 0 : index
    %2 = vector.load %arg2[%c0_3, %c0_4] : memref<16x24xbf16, #tpu.memory_space<vmem>>, vector<16x24xbf16>
    %c0_5 = arith.constant 0 : index
    %c0_6 = arith.constant 0 : index
    %3 = vector.load %arg3[%c0_5, %c0_6] : memref<24x16xbf16, #tpu.memory_space<vmem>>, vector<24x16xbf16>
    %c0_7 = arith.constant 0 : index
    %4 = memref.load %arg22[%c0_7] : memref<1xf32, #tpu.memory_space<smem>>
    %c0_8 = arith.constant 0 : index
    %c0_9 = arith.constant 0 : index
    %5 = vector.load %arg4[%c0_8, %c0_9] : memref<24x1xf32, #tpu.memory_space<vmem>>, vector<24x1xf32>
    %6 = vector.shape_cast %5 : vector<24x1xf32> to vector<24x1xf32>
    %7 = vector.broadcast %6 : vector<24x1xf32> to vector<24x128xf32>
    %c0_10 = arith.constant 0 : index
    %c0_11 = arith.constant 0 : index
    %8 = vector.load %arg5[%c0_10, %c0_11] : memref<16x1xf32, #tpu.memory_space<vmem>>, vector<16x1xf32>
    %9 = vector.shape_cast %8 : vector<16x1xf32> to vector<16x1xf32>
    %10 = vector.broadcast %9 : vector<16x1xf32> to vector<16x128xf32>
    %11 = arith.truncf %0 : vector<16x128xf32> to vector<16x128xbf16>
    %cst = arith.constant dense<0.000000e+00> : vector<24x128xf32>
    %12 = tpu.matmul %3, %11, %cst {dimension_numbers = #tpu.dot_dimension_numbers<[1], [0], [0], [1], [0, 0, 1, 1], [], []>} : vector<24x16xbf16>, vector<16x128xbf16>, vector<24x128xf32> -> vector<24x128xf32>
    %13 = vector.broadcast %4 : f32 to vector<24x128xf32>
    %14 = arith.mulf %12, %13 : vector<24x128xf32>
    %c0_12 = arith.constant 0 : index
    %15 = memref.load %arg20[%c0_12] : memref<4xf32, #tpu.memory_space<smem>>
    %16 = arith.subf %7, %14 : vector<24x128xf32>
    %17 = vector.broadcast %15 : f32 to vector<24x128xf32>
    %18 = arith.mulf %17, %16 : vector<24x128xf32>
    %19 = arith.addf %1, %18 : vector<24x128xf32>
    %20 = arith.truncf %19 : vector<24x128xf32> to vector<24x128xbf16>
    %c0_13 = arith.constant 0 : index
    %c0_14 = arith.constant 0 : index
    %c0_15 = arith.constant 0 : index
    %21 = vector.load %arg6[%c0_13, %c0_14, %c0_15] : memref<4x128x128xbf16, #tpu.memory_space<vmem>>, vector<1x128x128xbf16>
    %22 = vector.shape_cast %21 : vector<1x128x128xbf16> to vector<128x128xbf16>
    %cst_16 = arith.constant dense<0.000000e+00> : vector<24x128xf32>
    %23 = tpu.matmul %20, %22, %cst_16 {dimension_numbers = #tpu.dot_dimension_numbers<[1], [0], [0], [1], [0, 0, 1, 1], [], []>} : vector<24x128xbf16>, vector<128x128xbf16>, vector<24x128xf32> -> vector<24x128xf32>
    %c0_17 = arith.constant 0 : index
    %c0_18 = arith.constant 0 : index
    %c0_19 = arith.constant 0 : index
    %24 = vector.load %arg7[%c0_17, %c0_18, %c0_19] : memref<4x1x128xf32, #tpu.memory_space<vmem>>, vector<1x1x128xf32>
    %25 = vector.shape_cast %24 : vector<1x1x128xf32> to vector<1x128xf32>
    %26 = vector.broadcast %25 : vector<1x128xf32> to vector<24x128xf32>
    %27 = arith.addf %23, %26 : vector<24x128xf32>
    %cst_20 = arith.constant 0.000000e+00 : f32
    %28 = vector.broadcast %cst_20 : f32 to vector<24x128xf32>
    %29 = arith.maximumf %27, %28 : vector<24x128xf32>
    %30 = arith.truncf %29 : vector<24x128xf32> to vector<24x128xbf16>
    %c0_21 = arith.constant 0 : index
    %c0_22 = arith.constant 0 : index
    %c0_23 = arith.constant 0 : index
    %31 = vector.load %arg8[%c0_21, %c0_22, %c0_23] : memref<4x128x128xbf16, #tpu.memory_space<vmem>>, vector<1x128x128xbf16>
    %32 = vector.shape_cast %31 : vector<1x128x128xbf16> to vector<128x128xbf16>
    %cst_24 = arith.constant dense<0.000000e+00> : vector<24x128xf32>
    %33 = tpu.matmul %30, %32, %cst_24 {dimension_numbers = #tpu.dot_dimension_numbers<[1], [0], [0], [1], [0, 0, 1, 1], [], []>} : vector<24x128xbf16>, vector<128x128xbf16>, vector<24x128xf32> -> vector<24x128xf32>
    %c0_25 = arith.constant 0 : index
    %c0_26 = arith.constant 0 : index
    %c0_27 = arith.constant 0 : index
    %34 = vector.load %arg9[%c0_25, %c0_26, %c0_27] : memref<4x1x128xf32, #tpu.memory_space<vmem>>, vector<1x1x128xf32>
    %35 = vector.shape_cast %34 : vector<1x1x128xf32> to vector<1x128xf32>
    %36 = vector.broadcast %35 : vector<1x128xf32> to vector<24x128xf32>
    %37 = arith.addf %33, %36 : vector<24x128xf32>
    %cst_28 = arith.constant 0.000000e+00 : f32
    %38 = vector.broadcast %cst_28 : f32 to vector<24x128xf32>
    %39 = arith.maximumf %37, %38 : vector<24x128xf32>
    %cst_29 = arith.constant 2.000000e+00 : f32
    %40 = vector.broadcast %cst_29 : f32 to vector<24x128xf32>
    %41 = arith.mulf %40, %39 : vector<24x128xf32>
    %42 = arith.subf %41, %1 : vector<24x128xf32>
    %43 = arith.truncf %42 : vector<24x128xf32> to vector<24x128xbf16>
    %cst_30 = arith.constant dense<0.000000e+00> : vector<16x128xf32>
    %44 = tpu.matmul %2, %43, %cst_30 {dimension_numbers = #tpu.dot_dimension_numbers<[1], [0], [0], [1], [0, 0, 1, 1], [], []>} : vector<16x24xbf16>, vector<24x128xbf16>, vector<16x128xf32> -> vector<16x128xf32>
    %45 = vector.broadcast %4 : f32 to vector<16x128xf32>
    %46 = arith.mulf %44, %45 : vector<16x128xf32>
    %c0_31 = arith.constant 0 : index
    %47 = memref.load %arg21[%c0_31] : memref<4xf32, #tpu.memory_space<smem>>
    %48 = arith.subf %10, %46 : vector<16x128xf32>
    %49 = vector.broadcast %47 : f32 to vector<16x128xf32>
    %50 = arith.mulf %49, %48 : vector<16x128xf32>
    %51 = arith.subf %0, %50 : vector<16x128xf32>
    %52 = arith.truncf %51 : vector<16x128xf32> to vector<16x128xbf16>
    %c0_32 = arith.constant 0 : index
    %c0_33 = arith.constant 0 : index
    %c0_34 = arith.constant 0 : index
    %53 = vector.load %arg10[%c0_32, %c0_33, %c0_34] : memref<4x128x128xbf16, #tpu.memory_space<vmem>>, vector<1x128x128xbf16>
    %54 = vector.shape_cast %53 : vector<1x128x128xbf16> to vector<128x128xbf16>
    %cst_35 = arith.constant dense<0.000000e+00> : vector<16x128xf32>
    %55 = tpu.matmul %52, %54, %cst_35 {dimension_numbers = #tpu.dot_dimension_numbers<[1], [0], [0], [1], [0, 0, 1, 1], [], []>} : vector<16x128xbf16>, vector<128x128xbf16>, vector<16x128xf32> -> vector<16x128xf32>
    %c0_36 = arith.constant 0 : index
    %c0_37 = arith.constant 0 : index
    %c0_38 = arith.constant 0 : index
    %56 = vector.load %arg11[%c0_36, %c0_37, %c0_38] : memref<4x1x128xf32, #tpu.memory_space<vmem>>, vector<1x1x128xf32>
    %57 = vector.shape_cast %56 : vector<1x1x128xf32> to vector<1x128xf32>
    %58 = vector.broadcast %57 : vector<1x128xf32> to vector<16x128xf32>
    %59 = arith.addf %55, %58 : vector<16x128xf32>
    %cst_39 = arith.constant 0.000000e+00 : f32
    %60 = vector.broadcast %cst_39 : f32 to vector<16x128xf32>
    %61 = arith.maximumf %59, %60 : vector<16x128xf32>
    %62 = arith.truncf %61 : vector<16x128xf32> to vector<16x128xbf16>
    %c0_40 = arith.constant 0 : index
    %c0_41 = arith.constant 0 : index
    %c0_42 = arith.constant 0 : index
    %63 = vector.load %arg12[%c0_40, %c0_41, %c0_42] : memref<4x128x128xbf16, #tpu.memory_space<vmem>>, vector<1x128x128xbf16>
    %64 = vector.shape_cast %63 : vector<1x128x128xbf16> to vector<128x128xbf16>
    %cst_43 = arith.constant dense<0.000000e+00> : vector<16x128xf32>
    %65 = tpu.matmul %62, %64, %cst_43 {dimension_numbers = #tpu.dot_dimension_numbers<[1], [0], [0], [1], [0, 0, 1, 1], [], []>} : vector<16x128xbf16>, vector<128x128xbf16>, vector<16x128xf32> -> vector<16x128xf32>
    %c0_44 = arith.constant 0 : index
    %c0_45 = arith.constant 0 : index
    %c0_46 = arith.constant 0 : index
    %66 = vector.load %arg13[%c0_44, %c0_45, %c0_46] : memref<4x1x128xf32, #tpu.memory_space<vmem>>, vector<1x1x128xf32>
    %67 = vector.shape_cast %66 : vector<1x1x128xf32> to vector<1x128xf32>
    %68 = vector.broadcast %67 : vector<1x128xf32> to vector<16x128xf32>
    %69 = arith.addf %65, %68 : vector<16x128xf32>
    %cst_47 = arith.constant 0.000000e+00 : f32
    %70 = vector.broadcast %cst_47 : f32 to vector<16x128xf32>
    %71 = arith.maximumf %69, %70 : vector<16x128xf32>
    %72 = arith.truncf %71 : vector<16x128xf32> to vector<16x128xbf16>
    %cst_48 = arith.constant dense<0.000000e+00> : vector<24x128xf32>
    %73 = tpu.matmul %3, %72, %cst_48 {dimension_numbers = #tpu.dot_dimension_numbers<[1], [0], [0], [1], [0, 0, 1, 1], [], []>} : vector<24x16xbf16>, vector<16x128xbf16>, vector<24x128xf32> -> vector<24x128xf32>
    %74 = vector.broadcast %4 : f32 to vector<24x128xf32>
    %75 = arith.mulf %73, %74 : vector<24x128xf32>
    %c1 = arith.constant 1 : index
    %76 = memref.load %arg20[%c1] : memref<4xf32, #tpu.memory_space<smem>>
    %77 = arith.subf %7, %75 : vector<24x128xf32>
    %78 = vector.broadcast %76 : f32 to vector<24x128xf32>
    %79 = arith.mulf %78, %77 : vector<24x128xf32>
    %80 = arith.addf %39, %79 : vector<24x128xf32>
    %81 = arith.truncf %80 : vector<24x128xf32> to vector<24x128xbf16>
    %c1_49 = arith.constant 1 : index
    %c0_50 = arith.constant 0 : index
    %c0_51 = arith.constant 0 : index
    %82 = vector.load %arg6[%c1_49, %c0_50, %c0_51] : memref<4x128x128xbf16, #tpu.memory_space<vmem>>, vector<1x128x128xbf16>
    %83 = vector.shape_cast %82 : vector<1x128x128xbf16> to vector<128x128xbf16>
    %cst_52 = arith.constant dense<0.000000e+00> : vector<24x128xf32>
    %84 = tpu.matmul %81, %83, %cst_52 {dimension_numbers = #tpu.dot_dimension_numbers<[1], [0], [0], [1], [0, 0, 1, 1], [], []>} : vector<24x128xbf16>, vector<128x128xbf16>, vector<24x128xf32> -> vector<24x128xf32>
    %c1_53 = arith.constant 1 : index
    %c0_54 = arith.constant 0 : index
    %c0_55 = arith.constant 0 : index
    %85 = vector.load %arg7[%c1_53, %c0_54, %c0_55] : memref<4x1x128xf32, #tpu.memory_space<vmem>>, vector<1x1x128xf32>
    %86 = vector.shape_cast %85 : vector<1x1x128xf32> to vector<1x128xf32>
    %87 = vector.broadcast %86 : vector<1x128xf32> to vector<24x128xf32>
    %88 = arith.addf %84, %87 : vector<24x128xf32>
    %cst_56 = arith.constant 0.000000e+00 : f32
    %89 = vector.broadcast %cst_56 : f32 to vector<24x128xf32>
    %90 = arith.maximumf %88, %89 : vector<24x128xf32>
    %91 = arith.truncf %90 : vector<24x128xf32> to vector<24x128xbf16>
    %c1_57 = arith.constant 1 : index
    %c0_58 = arith.constant 0 : index
    %c0_59 = arith.constant 0 : index
    %92 = vector.load %arg8[%c1_57, %c0_58, %c0_59] : memref<4x128x128xbf16, #tpu.memory_space<vmem>>, vector<1x128x128xbf16>
    %93 = vector.shape_cast %92 : vector<1x128x128xbf16> to vector<128x128xbf16>
    %cst_60 = arith.constant dense<0.000000e+00> : vector<24x128xf32>
    %94 = tpu.matmul %91, %93, %cst_60 {dimension_numbers = #tpu.dot_dimension_numbers<[1], [0], [0], [1], [0, 0, 1, 1], [], []>} : vector<24x128xbf16>, vector<128x128xbf16>, vector<24x128xf32> -> vector<24x128xf32>
    %c1_61 = arith.constant 1 : index
    %c0_62 = arith.constant 0 : index
    %c0_63 = arith.constant 0 : index
    %95 = vector.load %arg9[%c1_61, %c0_62, %c0_63] : memref<4x1x128xf32, #tpu.memory_space<vmem>>, vector<1x1x128xf32>
    %96 = vector.shape_cast %95 : vector<1x1x128xf32> to vector<1x128xf32>
    %97 = vector.broadcast %96 : vector<1x128xf32> to vector<24x128xf32>
    %98 = arith.addf %94, %97 : vector<24x128xf32>
    %cst_64 = arith.constant 0.000000e+00 : f32
    %99 = vector.broadcast %cst_64 : f32 to vector<24x128xf32>
    %100 = arith.maximumf %98, %99 : vector<24x128xf32>
    %cst_65 = arith.constant 2.000000e+00 : f32
    %101 = vector.broadcast %cst_65 : f32 to vector<24x128xf32>
    %102 = arith.mulf %101, %100 : vector<24x128xf32>
    %103 = arith.subf %102, %39 : vector<24x128xf32>
    %104 = arith.truncf %103 : vector<24x128xf32> to vector<24x128xbf16>
    %cst_66 = arith.constant dense<0.000000e+00> : vector<16x128xf32>
    %105 = tpu.matmul %2, %104, %cst_66 {dimension_numbers = #tpu.dot_dimension_numbers<[1], [0], [0], [1], [0, 0, 1, 1], [], []>} : vector<16x24xbf16>, vector<24x128xbf16>, vector<16x128xf32> -> vector<16x128xf32>
    %106 = vector.broadcast %4 : f32 to vector<16x128xf32>
    %107 = arith.mulf %105, %106 : vector<16x128xf32>
    %c1_67 = arith.constant 1 : index
    %108 = memref.load %arg21[%c1_67] : memref<4xf32, #tpu.memory_space<smem>>
    %109 = arith.subf %10, %107 : vector<16x128xf32>
    %110 = vector.broadcast %108 : f32 to vector<16x128xf32>
    %111 = arith.mulf %110, %109 : vector<16x128xf32>
    %112 = arith.subf %71, %111 : vector<16x128xf32>
    %113 = arith.truncf %112 : vector<16x128xf32> to vector<16x128xbf16>
    %c1_68 = arith.constant 1 : index
    %c0_69 = arith.constant 0 : index
    %c0_70 = arith.constant 0 : index
    %114 = vector.load %arg10[%c1_68, %c0_69, %c0_70] : memref<4x128x128xbf16, #tpu.memory_space<vmem>>, vector<1x128x128xbf16>
    %115 = vector.shape_cast %114 : vector<1x128x128xbf16> to vector<128x128xbf16>
    %cst_71 = arith.constant dense<0.000000e+00> : vector<16x128xf32>
    %116 = tpu.matmul %113, %115, %cst_71 {dimension_numbers = #tpu.dot_dimension_numbers<[1], [0], [0], [1], [0, 0, 1, 1], [], []>} : vector<16x128xbf16>, vector<128x128xbf16>, vector<16x128xf32> -> vector<16x128xf32>
    %c1_72 = arith.constant 1 : index
    %c0_73 = arith.constant 0 : index
    %c0_74 = arith.constant 0 : index
    %117 = vector.load %arg11[%c1_72, %c0_73, %c0_74] : memref<4x1x128xf32, #tpu.memory_space<vmem>>, vector<1x1x128xf32>
    %118 = vector.shape_cast %117 : vector<1x1x128xf32> to vector<1x128xf32>
    %119 = vector.broadcast %118 : vector<1x128xf32> to vector<16x128xf32>
    %120 = arith.addf %116, %119 : vector<16x128xf32>
    %cst_75 = arith.constant 0.000000e+00 : f32
    %121 = vector.broadcast %cst_75 : f32 to vector<16x128xf32>
    %122 = arith.maximumf %120, %121 : vector<16x128xf32>
    %123 = arith.truncf %122 : vector<16x128xf32> to vector<16x128xbf16>
    %c1_76 = arith.constant 1 : index
    %c0_77 = arith.constant 0 : index
    %c0_78 = arith.constant 0 : index
    %124 = vector.load %arg12[%c1_76, %c0_77, %c0_78] : memref<4x128x128xbf16, #tpu.memory_space<vmem>>, vector<1x128x128xbf16>
    %125 = vector.shape_cast %124 : vector<1x128x128xbf16> to vector<128x128xbf16>
    %cst_79 = arith.constant dense<0.000000e+00> : vector<16x128xf32>
    %126 = tpu.matmul %123, %125, %cst_79 {dimension_numbers = #tpu.dot_dimension_numbers<[1], [0], [0], [1], [0, 0, 1, 1], [], []>} : vector<16x128xbf16>, vector<128x128xbf16>, vector<16x128xf32> -> vector<16x128xf32>
    %c1_80 = arith.constant 1 : index
    %c0_81 = arith.constant 0 : index
    %c0_82 = arith.constant 0 : index
    %127 = vector.load %arg13[%c1_80, %c0_81, %c0_82] : memref<4x1x128xf32, #tpu.memory_space<vmem>>, vector<1x1x128xf32>
    %128 = vector.shape_cast %127 : vector<1x1x128xf32> to vector<1x128xf32>
    %129 = vector.broadcast %128 : vector<1x128xf32> to vector<16x128xf32>
    %130 = arith.addf %126, %129 : vector<16x128xf32>
    %cst_83 = arith.constant 0.000000e+00 : f32
    %131 = vector.broadcast %cst_83 : f32 to vector<16x128xf32>
    %132 = arith.maximumf %130, %131 : vector<16x128xf32>
    %133 = arith.truncf %132 : vector<16x128xf32> to vector<16x128xbf16>
    %cst_84 = arith.constant dense<0.000000e+00> : vector<24x128xf32>
    %134 = tpu.matmul %3, %133, %cst_84 {dimension_numbers = #tpu.dot_dimension_numbers<[1], [0], [0], [1], [0, 0, 1, 1], [], []>} : vector<24x16xbf16>, vector<16x128xbf16>, vector<24x128xf32> -> vector<24x128xf32>
    %135 = vector.broadcast %4 : f32 to vector<24x128xf32>
    %136 = arith.mulf %134, %135 : vector<24x128xf32>
    %c2 = arith.constant 2 : index
    %137 = memref.load %arg20[%c2] : memref<4xf32, #tpu.memory_space<smem>>
    %138 = arith.subf %7, %136 : vector<24x128xf32>
    %139 = vector.broadcast %137 : f32 to vector<24x128xf32>
    %140 = arith.mulf %139, %138 : vector<24x128xf32>
    %141 = arith.addf %100, %140 : vector<24x128xf32>
    %142 = arith.truncf %141 : vector<24x128xf32> to vector<24x128xbf16>
    %c2_85 = arith.constant 2 : index
    %c0_86 = arith.constant 0 : index
    %c0_87 = arith.constant 0 : index
    %143 = vector.load %arg6[%c2_85, %c0_86, %c0_87] : memref<4x128x128xbf16, #tpu.memory_space<vmem>>, vector<1x128x128xbf16>
    %144 = vector.shape_cast %143 : vector<1x128x128xbf16> to vector<128x128xbf16>
    %cst_88 = arith.constant dense<0.000000e+00> : vector<24x128xf32>
    %145 = tpu.matmul %142, %144, %cst_88 {dimension_numbers = #tpu.dot_dimension_numbers<[1], [0], [0], [1], [0, 0, 1, 1], [], []>} : vector<24x128xbf16>, vector<128x128xbf16>, vector<24x128xf32> -> vector<24x128xf32>
    %c2_89 = arith.constant 2 : index
    %c0_90 = arith.constant 0 : index
    %c0_91 = arith.constant 0 : index
    %146 = vector.load %arg7[%c2_89, %c0_90, %c0_91] : memref<4x1x128xf32, #tpu.memory_space<vmem>>, vector<1x1x128xf32>
    %147 = vector.shape_cast %146 : vector<1x1x128xf32> to vector<1x128xf32>
    %148 = vector.broadcast %147 : vector<1x128xf32> to vector<24x128xf32>
    %149 = arith.addf %145, %148 : vector<24x128xf32>
    %cst_92 = arith.constant 0.000000e+00 : f32
    %150 = vector.broadcast %cst_92 : f32 to vector<24x128xf32>
    %151 = arith.maximumf %149, %150 : vector<24x128xf32>
    %152 = arith.truncf %151 : vector<24x128xf32> to vector<24x128xbf16>
    %c2_93 = arith.constant 2 : index
    %c0_94 = arith.constant 0 : index
    %c0_95 = arith.constant 0 : index
    %153 = vector.load %arg8[%c2_93, %c0_94, %c0_95] : memref<4x128x128xbf16, #tpu.memory_space<vmem>>, vector<1x128x128xbf16>
    %154 = vector.shape_cast %153 : vector<1x128x128xbf16> to vector<128x128xbf16>
    %cst_96 = arith.constant dense<0.000000e+00> : vector<24x128xf32>
    %155 = tpu.matmul %152, %154, %cst_96 {dimension_numbers = #tpu.dot_dimension_numbers<[1], [0], [0], [1], [0, 0, 1, 1], [], []>} : vector<24x128xbf16>, vector<128x128xbf16>, vector<24x128xf32> -> vector<24x128xf32>
    %c2_97 = arith.constant 2 : index
    %c0_98 = arith.constant 0 : index
    %c0_99 = arith.constant 0 : index
    %156 = vector.load %arg9[%c2_97, %c0_98, %c0_99] : memref<4x1x128xf32, #tpu.memory_space<vmem>>, vector<1x1x128xf32>
    %157 = vector.shape_cast %156 : vector<1x1x128xf32> to vector<1x128xf32>
    %158 = vector.broadcast %157 : vector<1x128xf32> to vector<24x128xf32>
    %159 = arith.addf %155, %158 : vector<24x128xf32>
    %cst_100 = arith.constant 0.000000e+00 : f32
    %160 = vector.broadcast %cst_100 : f32 to vector<24x128xf32>
    %161 = arith.maximumf %159, %160 : vector<24x128xf32>
    %cst_101 = arith.constant 2.000000e+00 : f32
    %162 = vector.broadcast %cst_101 : f32 to vector<24x128xf32>
    %163 = arith.mulf %162, %161 : vector<24x128xf32>
    %164 = arith.subf %163, %100 : vector<24x128xf32>
    %165 = arith.truncf %164 : vector<24x128xf32> to vector<24x128xbf16>
    %cst_102 = arith.constant dense<0.000000e+00> : vector<16x128xf32>
    %166 = tpu.matmul %2, %165, %cst_102 {dimension_numbers = #tpu.dot_dimension_numbers<[1], [0], [0], [1], [0, 0, 1, 1], [], []>} : vector<16x24xbf16>, vector<24x128xbf16>, vector<16x128xf32> -> vector<16x128xf32>
    %167 = vector.broadcast %4 : f32 to vector<16x128xf32>
    %168 = arith.mulf %166, %167 : vector<16x128xf32>
    %c2_103 = arith.constant 2 : index
    %169 = memref.load %arg21[%c2_103] : memref<4xf32, #tpu.memory_space<smem>>
    %170 = arith.subf %10, %168 : vector<16x128xf32>
    %171 = vector.broadcast %169 : f32 to vector<16x128xf32>
    %172 = arith.mulf %171, %170 : vector<16x128xf32>
    %173 = arith.subf %132, %172 : vector<16x128xf32>
    %174 = arith.truncf %173 : vector<16x128xf32> to vector<16x128xbf16>
    %c2_104 = arith.constant 2 : index
    %c0_105 = arith.constant 0 : index
    %c0_106 = arith.constant 0 : index
    %175 = vector.load %arg10[%c2_104, %c0_105, %c0_106] : memref<4x128x128xbf16, #tpu.memory_space<vmem>>, vector<1x128x128xbf16>
    %176 = vector.shape_cast %175 : vector<1x128x128xbf16> to vector<128x128xbf16>
    %cst_107 = arith.constant dense<0.000000e+00> : vector<16x128xf32>
    %177 = tpu.matmul %174, %176, %cst_107 {dimension_numbers = #tpu.dot_dimension_numbers<[1], [0], [0], [1], [0, 0, 1, 1], [], []>} : vector<16x128xbf16>, vector<128x128xbf16>, vector<16x128xf32> -> vector<16x128xf32>
    %c2_108 = arith.constant 2 : index
    %c0_109 = arith.constant 0 : index
    %c0_110 = arith.constant 0 : index
    %178 = vector.load %arg11[%c2_108, %c0_109, %c0_110] : memref<4x1x128xf32, #tpu.memory_space<vmem>>, vector<1x1x128xf32>
    %179 = vector.shape_cast %178 : vector<1x1x128xf32> to vector<1x128xf32>
    %180 = vector.broadcast %179 : vector<1x128xf32> to vector<16x128xf32>
    %181 = arith.addf %177, %180 : vector<16x128xf32>
    %cst_111 = arith.constant 0.000000e+00 : f32
    %182 = vector.broadcast %cst_111 : f32 to vector<16x128xf32>
    %183 = arith.maximumf %181, %182 : vector<16x128xf32>
    %184 = arith.truncf %183 : vector<16x128xf32> to vector<16x128xbf16>
    %c2_112 = arith.constant 2 : index
    %c0_113 = arith.constant 0 : index
    %c0_114 = arith.constant 0 : index
    %185 = vector.load %arg12[%c2_112, %c0_113, %c0_114] : memref<4x128x128xbf16, #tpu.memory_space<vmem>>, vector<1x128x128xbf16>
    %186 = vector.shape_cast %185 : vector<1x128x128xbf16> to vector<128x128xbf16>
    %cst_115 = arith.constant dense<0.000000e+00> : vector<16x128xf32>
    %187 = tpu.matmul %184, %186, %cst_115 {dimension_numbers = #tpu.dot_dimension_numbers<[1], [0], [0], [1], [0, 0, 1, 1], [], []>} : vector<16x128xbf16>, vector<128x128xbf16>, vector<16x128xf32> -> vector<16x128xf32>
    %c2_116 = arith.constant 2 : index
    %c0_117 = arith.constant 0 : index
    %c0_118 = arith.constant 0 : index
    %188 = vector.load %arg13[%c2_116, %c0_117, %c0_118] : memref<4x1x128xf32, #tpu.memory_space<vmem>>, vector<1x1x128xf32>
    %189 = vector.shape_cast %188 : vector<1x1x128xf32> to vector<1x128xf32>
    %190 = vector.broadcast %189 : vector<1x128xf32> to vector<16x128xf32>
    %191 = arith.addf %187, %190 : vector<16x128xf32>
    %cst_119 = arith.constant 0.000000e+00 : f32
    %192 = vector.broadcast %cst_119 : f32 to vector<16x128xf32>
    %193 = arith.maximumf %191, %192 : vector<16x128xf32>
    %194 = arith.truncf %193 : vector<16x128xf32> to vector<16x128xbf16>
    %cst_120 = arith.constant dense<0.000000e+00> : vector<24x128xf32>
    %195 = tpu.matmul %3, %194, %cst_120 {dimension_numbers = #tpu.dot_dimension_numbers<[1], [0], [0], [1], [0, 0, 1, 1], [], []>} : vector<24x16xbf16>, vector<16x128xbf16>, vector<24x128xf32> -> vector<24x128xf32>
    %196 = vector.broadcast %4 : f32 to vector<24x128xf32>
    %197 = arith.mulf %195, %196 : vector<24x128xf32>
    %c3 = arith.constant 3 : index
    %198 = memref.load %arg20[%c3] : memref<4xf32, #tpu.memory_space<smem>>
    %199 = arith.subf %7, %197 : vector<24x128xf32>
    %200 = vector.broadcast %198 : f32 to vector<24x128xf32>
    %201 = arith.mulf %200, %199 : vector<24x128xf32>
    %202 = arith.addf %161, %201 : vector<24x128xf32>
    %203 = arith.truncf %202 : vector<24x128xf32> to vector<24x128xbf16>
    %c3_121 = arith.constant 3 : index
    %c0_122 = arith.constant 0 : index
    %c0_123 = arith.constant 0 : index
    %204 = vector.load %arg6[%c3_121, %c0_122, %c0_123] : memref<4x128x128xbf16, #tpu.memory_space<vmem>>, vector<1x128x128xbf16>
    %205 = vector.shape_cast %204 : vector<1x128x128xbf16> to vector<128x128xbf16>
    %cst_124 = arith.constant dense<0.000000e+00> : vector<24x128xf32>
    %206 = tpu.matmul %203, %205, %cst_124 {dimension_numbers = #tpu.dot_dimension_numbers<[1], [0], [0], [1], [0, 0, 1, 1], [], []>} : vector<24x128xbf16>, vector<128x128xbf16>, vector<24x128xf32> -> vector<24x128xf32>
    %c3_125 = arith.constant 3 : index
    %c0_126 = arith.constant 0 : index
    %c0_127 = arith.constant 0 : index
    %207 = vector.load %arg7[%c3_125, %c0_126, %c0_127] : memref<4x1x128xf32, #tpu.memory_space<vmem>>, vector<1x1x128xf32>
    %208 = vector.shape_cast %207 : vector<1x1x128xf32> to vector<1x128xf32>
    %209 = vector.broadcast %208 : vector<1x128xf32> to vector<24x128xf32>
    %210 = arith.addf %206, %209 : vector<24x128xf32>
    %cst_128 = arith.constant 0.000000e+00 : f32
    %211 = vector.broadcast %cst_128 : f32 to vector<24x128xf32>
    %212 = arith.maximumf %210, %211 : vector<24x128xf32>
    %213 = arith.truncf %212 : vector<24x128xf32> to vector<24x128xbf16>
    %c3_129 = arith.constant 3 : index
    %c0_130 = arith.constant 0 : index
    %c0_131 = arith.constant 0 : index
    %214 = vector.load %arg8[%c3_129, %c0_130, %c0_131] : memref<4x128x128xbf16, #tpu.memory_space<vmem>>, vector<1x128x128xbf16>
    %215 = vector.shape_cast %214 : vector<1x128x128xbf16> to vector<128x128xbf16>
    %cst_132 = arith.constant dense<0.000000e+00> : vector<24x128xf32>
    %216 = tpu.matmul %213, %215, %cst_132 {dimension_numbers = #tpu.dot_dimension_numbers<[1], [0], [0], [1], [0, 0, 1, 1], [], []>} : vector<24x128xbf16>, vector<128x128xbf16>, vector<24x128xf32> -> vector<24x128xf32>
    %c3_133 = arith.constant 3 : index
    %c0_134 = arith.constant 0 : index
    %c0_135 = arith.constant 0 : index
    %217 = vector.load %arg9[%c3_133, %c0_134, %c0_135] : memref<4x1x128xf32, #tpu.memory_space<vmem>>, vector<1x1x128xf32>
    %218 = vector.shape_cast %217 : vector<1x1x128xf32> to vector<1x128xf32>
    %219 = vector.broadcast %218 : vector<1x128xf32> to vector<24x128xf32>
    %220 = arith.addf %216, %219 : vector<24x128xf32>
    %cst_136 = arith.constant 0.000000e+00 : f32
    %221 = vector.broadcast %cst_136 : f32 to vector<24x128xf32>
    %222 = arith.maximumf %220, %221 : vector<24x128xf32>
    %cst_137 = arith.constant 2.000000e+00 : f32
    %223 = vector.broadcast %cst_137 : f32 to vector<24x128xf32>
    %224 = arith.mulf %223, %222 : vector<24x128xf32>
    %225 = arith.subf %224, %161 : vector<24x128xf32>
    %226 = arith.truncf %225 : vector<24x128xf32> to vector<24x128xbf16>
    %cst_138 = arith.constant dense<0.000000e+00> : vector<16x128xf32>
    %227 = tpu.matmul %2, %226, %cst_138 {dimension_numbers = #tpu.dot_dimension_numbers<[1], [0], [0], [1], [0, 0, 1, 1], [], []>} : vector<16x24xbf16>, vector<24x128xbf16>, vector<16x128xf32> -> vector<16x128xf32>
    %228 = vector.broadcast %4 : f32 to vector<16x128xf32>
    %229 = arith.mulf %227, %228 : vector<16x128xf32>
    %c3_139 = arith.constant 3 : index
    %230 = memref.load %arg21[%c3_139] : memref<4xf32, #tpu.memory_space<smem>>
    %231 = arith.subf %10, %229 : vector<16x128xf32>
    %232 = vector.broadcast %230 : f32 to vector<16x128xf32>
    %233 = arith.mulf %232, %231 : vector<16x128xf32>
    %234 = arith.subf %193, %233 : vector<16x128xf32>
    %235 = arith.truncf %234 : vector<16x128xf32> to vector<16x128xbf16>
    %c3_140 = arith.constant 3 : index
    %c0_141 = arith.constant 0 : index
    %c0_142 = arith.constant 0 : index
    %236 = vector.load %arg10[%c3_140, %c0_141, %c0_142] : memref<4x128x128xbf16, #tpu.memory_space<vmem>>, vector<1x128x128xbf16>
    %237 = vector.shape_cast %236 : vector<1x128x128xbf16> to vector<128x128xbf16>
    %cst_143 = arith.constant dense<0.000000e+00> : vector<16x128xf32>
    %238 = tpu.matmul %235, %237, %cst_143 {dimension_numbers = #tpu.dot_dimension_numbers<[1], [0], [0], [1], [0, 0, 1, 1], [], []>} : vector<16x128xbf16>, vector<128x128xbf16>, vector<16x128xf32> -> vector<16x128xf32>
    %c3_144 = arith.constant 3 : index
    %c0_145 = arith.constant 0 : index
    %c0_146 = arith.constant 0 : index
    %239 = vector.load %arg11[%c3_144, %c0_145, %c0_146] : memref<4x1x128xf32, #tpu.memory_space<vmem>>, vector<1x1x128xf32>
    %240 = vector.shape_cast %239 : vector<1x1x128xf32> to vector<1x128xf32>
    %241 = vector.broadcast %240 : vector<1x128xf32> to vector<16x128xf32>
    %242 = arith.addf %238, %241 : vector<16x128xf32>
    %cst_147 = arith.constant 0.000000e+00 : f32
    %243 = vector.broadcast %cst_147 : f32 to vector<16x128xf32>
    %244 = arith.maximumf %242, %243 : vector<16x128xf32>
    %245 = arith.truncf %244 : vector<16x128xf32> to vector<16x128xbf16>
    %c3_148 = arith.constant 3 : index
    %c0_149 = arith.constant 0 : index
    %c0_150 = arith.constant 0 : index
    %246 = vector.load %arg12[%c3_148, %c0_149, %c0_150] : memref<4x128x128xbf16, #tpu.memory_space<vmem>>, vector<1x128x128xbf16>
    %247 = vector.shape_cast %246 : vector<1x128x128xbf16> to vector<128x128xbf16>
    %cst_151 = arith.constant dense<0.000000e+00> : vector<16x128xf32>
    %248 = tpu.matmul %245, %247, %cst_151 {dimension_numbers = #tpu.dot_dimension_numbers<[1], [0], [0], [1], [0, 0, 1, 1], [], []>} : vector<16x128xbf16>, vector<128x128xbf16>, vector<16x128xf32> -> vector<16x128xf32>
    %c3_152 = arith.constant 3 : index
    %c0_153 = arith.constant 0 : index
    %c0_154 = arith.constant 0 : index
    %249 = vector.load %arg13[%c3_152, %c0_153, %c0_154] : memref<4x1x128xf32, #tpu.memory_space<vmem>>, vector<1x1x128xf32>
    %250 = vector.shape_cast %249 : vector<1x1x128xf32> to vector<1x128xf32>
    %251 = vector.broadcast %250 : vector<1x128xf32> to vector<16x128xf32>
    %252 = arith.addf %248, %251 : vector<16x128xf32>
    %cst_155 = arith.constant 0.000000e+00 : f32
    %253 = vector.broadcast %cst_155 : f32 to vector<16x128xf32>
    %254 = arith.maximumf %252, %253 : vector<16x128xf32>
    %255 = arith.truncf %222 : vector<24x128xf32> to vector<24x128xbf16>
    %c0_156 = arith.constant 0 : index
    %c0_157 = arith.constant 0 : index
    %256 = vector.load %arg14[%c0_156, %c0_157] : memref<128x128xbf16, #tpu.memory_space<vmem>>, vector<128x128xbf16>
    %cst_158 = arith.constant dense<0.000000e+00> : vector<24x128xf32>
    %257 = tpu.matmul %255, %256, %cst_158 {dimension_numbers = #tpu.dot_dimension_numbers<[1], [0], [0], [1], [0, 0, 1, 1], [], []>} : vector<24x128xbf16>, vector<128x128xbf16>, vector<24x128xf32> -> vector<24x128xf32>
    %c0_159 = arith.constant 0 : index
    %c0_160 = arith.constant 0 : index
    %258 = vector.load %arg15[%c0_159, %c0_160] : memref<1x128xf32, #tpu.memory_space<vmem>>, vector<1x128xf32>
    %259 = vector.broadcast %258 : vector<1x128xf32> to vector<24x128xf32>
    %260 = arith.addf %257, %259 : vector<24x128xf32>
    %cst_161 = arith.constant 0.000000e+00 : f32
    %261 = vector.broadcast %cst_161 : f32 to vector<24x128xf32>
    %262 = arith.maximumf %260, %261 : vector<24x128xf32>
    %c0_162 = arith.constant 0 : index
    %c0_163 = arith.constant 0 : index
    %263 = vector.load %arg16[%c0_162, %c0_163] : memref<8x128xbf16, #tpu.memory_space<vmem>>, vector<8x128xbf16>
    %264 = arith.truncf %262 : vector<24x128xf32> to vector<24x128xbf16>
    %cst_164 = arith.constant dense<0.000000e+00> : vector<8x24xf32>
    %265 = tpu.matmul %263, %264, %cst_164 {dimension_numbers = #tpu.dot_dimension_numbers<[1], [1], [0], [0], [0, 0, 1, 0], [], []>} : vector<8x128xbf16>, vector<24x128xbf16>, vector<8x24xf32> -> vector<8x24xf32>
    %c0_165 = arith.constant 0 : index
    %c0_166 = arith.constant 0 : index
    %266 = vector.load %arg23[%c0_165, %c0_166] : memref<8x24xf32, #tpu.memory_space<vmem>>, vector<8x24xf32>
    tpu.vector_store %arg23[%c0_165, %c0_166], %265 {strides = array<i32>} : memref<8x24xf32, #tpu.memory_space<vmem>>, vector<8x24xf32>,
    %267 = arith.truncf %254 : vector<16x128xf32> to vector<16x128xbf16>
    %c0_167 = arith.constant 0 : index
    %c0_168 = arith.constant 0 : index
    %268 = vector.load %arg17[%c0_167, %c0_168] : memref<128x128xbf16, #tpu.memory_space<vmem>>, vector<128x128xbf16>
    %cst_169 = arith.constant dense<0.000000e+00> : vector<16x128xf32>
    %269 = tpu.matmul %267, %268, %cst_169 {dimension_numbers = #tpu.dot_dimension_numbers<[1], [0], [0], [1], [0, 0, 1, 1], [], []>} : vector<16x128xbf16>, vector<128x128xbf16>, vector<16x128xf32> -> vector<16x128xf32>
    %c0_170 = arith.constant 0 : index
    %c0_171 = arith.constant 0 : index
    %270 = vector.load %arg18[%c0_170, %c0_171] : memref<1x128xf32, #tpu.memory_space<vmem>>, vector<1x128xf32>
    %271 = vector.broadcast %270 : vector<1x128xf32> to vector<16x128xf32>
    %272 = arith.addf %269, %271 : vector<16x128xf32>
    %cst_172 = arith.constant 0.000000e+00 : f32
    %273 = vector.broadcast %cst_172 : f32 to vector<16x128xf32>
    %274 = arith.maximumf %272, %273 : vector<16x128xf32>
    %c0_173 = arith.constant 0 : index
    %c0_174 = arith.constant 0 : index
    %275 = vector.load %arg19[%c0_173, %c0_174] : memref<8x128xbf16, #tpu.memory_space<vmem>>, vector<8x128xbf16>
    %276 = arith.truncf %274 : vector<16x128xf32> to vector<16x128xbf16>
    %cst_175 = arith.constant dense<0.000000e+00> : vector<8x16xf32>
    %277 = tpu.matmul %275, %276, %cst_175 {dimension_numbers = #tpu.dot_dimension_numbers<[1], [1], [0], [0], [0, 0, 1, 0], [], []>} : vector<8x128xbf16>, vector<16x128xbf16>, vector<8x16xf32> -> vector<8x16xf32>
    %c0_176 = arith.constant 0 : index
    %c0_177 = arith.constant 0 : index
    %278 = vector.load %arg24[%c0_176, %c0_177] : memref<8x16xf32, #tpu.memory_space<vmem>>, vector<8x16xf32>
    tpu.vector_store %arg24[%c0_176, %c0_177], %277 {strides = array<i32>} : memref<8x16xf32, #tpu.memory_space<vmem>>, vector<8x16xf32>,
    return
  }
}

</mosaic_0001>

<llo_original>
// kernel: gcn_policy_forward.1
$region0: #{gcn_policy_forward.1}
  #allocation0 [shape = 'u32[]', space=smem, size = 0x4, offset = 0x4, fixed_abs, tag = 'smem constant byte address 0x4 - core index']
  #allocation1 [shape = 'u32[72,128]{1,0:T(1,128)}', space=vmem, size = 0x9000, scoped, tag = 'internal scratch']
  #allocation2 [shape = 'f32[1]{0:T(128)S(6)}', space=smem, size = 0x200, scoped, tag = 'scoped memory for gcn_policy_forward.1']
  %s0 = inlined_call_operand.vmem [shape: f32[16,128], index: 0, kind: input, shape index: {}]
  %s1 = inlined_call_operand.vmem [shape: f32[24,128], index: 1, kind: input, shape index: {}]
  %s2 = inlined_call_operand.vmem [shape: bf16[16,24], index: 2, kind: input, shape index: {}]
  %s3 = inlined_call_operand.vmem [shape: bf16[24,16], index: 3, kind: input, shape index: {}]
  %s4 = inlined_call_operand.vmem [shape: f32[24,1], index: 4, kind: input, shape index: {}]
  %s5 = inlined_call_operand.vmem [shape: f32[16,1], index: 5, kind: input, shape index: {}]
  %s6 = inlined_call_operand.vmem [shape: bf16[4,128,128], index: 6, kind: input, shape index: {}]
  %s7 = inlined_call_operand.vmem [shape: f32[4,1,128], index: 7, kind: input, shape index: {}]
  %s8 = inlined_call_operand.vmem [shape: bf16[4,128,128], index: 8, kind: input, shape index: {}]
  %s9 = inlined_call_operand.vmem [shape: f32[4,1,128], index: 9, kind: input, shape index: {}]
  %s10 = inlined_call_operand.vmem [shape: bf16[4,128,128], index: 10, kind: input, shape index: {}]
  %s11 = inlined_call_operand.vmem [shape: f32[4,1,128], index: 11, kind: input, shape index: {}]
  %s12 = inlined_call_operand.vmem [shape: bf16[4,128,128], index: 12, kind: input, shape index: {}]
  %s13 = inlined_call_operand.vmem [shape: f32[4,1,128], index: 13, kind: input, shape index: {}]
  %s14 = inlined_call_operand.vmem [shape: bf16[128,128], index: 14, kind: input, shape index: {}]
  %s15 = inlined_call_operand.vmem [shape: f32[1,128], index: 15, kind: input, shape index: {}]
  %s16 = inlined_call_operand.vmem [shape: bf16[8,128], index: 16, kind: input, shape index: {}]
  %s17 = inlined_call_operand.vmem [shape: bf16[128,128], index: 17, kind: input, shape index: {}]
  %s18 = inlined_call_operand.vmem [shape: f32[1,128], index: 18, kind: input, shape index: {}]
  %s19 = inlined_call_operand.vmem [shape: bf16[8,128], index: 19, kind: input, shape index: {}]
  %s20 = inlined_call_operand.vmem [shape: f32[4], index: 20, kind: input, shape index: {}]
  %s21 = inlined_call_operand.vmem [shape: f32[4], index: 21, kind: input, shape index: {}]
  %s22 = inlined_call_operand.<no memory space> [shape: f32[1], index: 22, kind: input, shape index: {}]
  %s23 = inlined_call_operand.vmem [shape: f32[8,24], index: 23, kind: output, shape index: {0}]
  %s24 = inlined_call_operand.vmem [shape: f32[8,16], index: 24, kind: output, shape index: {1}]
  %25 = xla_tuple %s23, %s24
  %s26 = sld [smem:[#allocation0]]
  $region118: #{gcn_policy_forward.1} parent=0
    _
  %s28 = ssub.s32 1, %s26
  %s29 = scalar_select 0, %s28, %s26
  %30 = sst [smem:[#allocation2]] %s22
  $region1: #{gcn_policy_forward.1} parent=0
    #allocation3 [shape = 'u8[512]{0}', space=smem, size = 0x200, scoped, tag = 'input window, operand 20, single buffered']
    #allocation4 [shape = 's32[1]{0}', space=sflag, size = 0x4, scoped, tag = 'scoped memory for gcn_policy_forward.1']
    #allocation5 [shape = 'u8[512]{0}', space=smem, size = 0x200, scoped, tag = 'input window, operand 21, single buffered']
    #allocation6 [shape = 's32[1]{0}', space=sflag, size = 0x4, scoped, tag = 'scoped memory for gcn_policy_forward.1']
    %31 = vsyncpa [#allocation4], 0
    %32 = vsyncpa [#allocation6], 0
    // Predicated region
    $region2: #{gcn_policy_forward.1} parent=1 // pred_check
      _
    $region3: #{gcn_policy_forward.1} parent=1 // pred_check_branch
      %34 = sbr.rel (0) target = $region5
    $region4: #{gcn_policy_forward.1} parent=1 // pred_region
      _
    $region5: #{gcn_policy_forward.1} parent=1 // pred_fallthru
      _
    // Predicated region
    $region6: #{gcn_policy_forward.1} parent=1 // pred_check
      _
    $region7: #{gcn_policy_forward.1} parent=1 // pred_check_branch
      %36 = sbr.rel (0) target = $region9
    $region8: #{gcn_policy_forward.1} parent=1 // pred_region
      _
    $region9: #{gcn_policy_forward.1} parent=1 // pred_fallthru
      _
    // Predicated region
    $region10: #{gcn_policy_forward.1} parent=1 // pred_check
      _
    $region11: #{gcn_policy_forward.1} parent=1 // pred_check_branch
      %38 = sbr.rel (0) target = $region13
    $region12: #{gcn_policy_forward.1} parent=1 // pred_region
      _
    $region13: #{gcn_policy_forward.1} parent=1 // pred_fallthru
      _
    // Predicated region
    $region14: #{gcn_policy_forward.1} parent=1 // pred_check
      _
    $region15: #{gcn_policy_forward.1} parent=1 // pred_check_branch
      %40 = sbr.rel (0) target = $region17
    $region16: #{gcn_policy_forward.1} parent=1 // pred_region
      _
    $region17: #{gcn_policy_forward.1} parent=1 // pred_fallthru
      _
    // Predicated region
    $region18: #{gcn_policy_forward.1} parent=1 // pred_check
      _
    $region19: #{gcn_policy_forward.1} parent=1 // pred_check_branch
      %42 = sbr.rel (0) target = $region21
    $region20: #{gcn_policy_forward.1} parent=1 // pred_region
      _
    $region21: #{gcn_policy_forward.1} parent=1 // pred_fallthru
      _
    // Predicated region
    $region22: #{gcn_policy_forward.1} parent=1 // pred_check
      _
    $region23: #{gcn_policy_forward.1} parent=1 // pred_check_branch
      %44 = sbr.rel (0) target = $region25
    $region24: #{gcn_policy_forward.1} parent=1 // pred_region
      _
    $region25: #{gcn_policy_forward.1} parent=1 // pred_fallthru
      _
    // Predicated region
    $region26: #{gcn_policy_forward.1} parent=1 // pred_check
      _
    $region27: #{gcn_policy_forward.1} parent=1 // pred_check_branch
      %46 = sbr.rel (0) target = $region29
    $region28: #{gcn_policy_forward.1} parent=1 // pred_region
      _
    $region29: #{gcn_policy_forward.1} parent=1 // pred_fallthru
      _
    // Predicated region
    $region30: #{gcn_policy_forward.1} parent=1 // pred_check
      _
    $region31: #{gcn_policy_forward.1} parent=1 // pred_check_branch
      %48 = sbr.rel (0) target = $region33
    $region32: #{gcn_policy_forward.1} parent=1 // pred_region
      _
    $region33: #{gcn_policy_forward.1} parent=1 // pred_fallthru
      _
    // Predicated region
    $region34: #{gcn_policy_forward.1} parent=1 // pred_check
      _
    $region35: #{gcn_policy_forward.1} parent=1 // pred_check_branch
      %50 = sbr.rel (0) target = $region37
    $region36: #{gcn_policy_forward.1} parent=1 // pred_region
      _
    $region37: #{gcn_policy_forward.1} parent=1 // pred_fallthru
      _
    // Predicated region
    $region38: #{gcn_policy_forward.1} parent=1 // pred_check
      _
    $region39: #{gcn_policy_forward.1} parent=1 // pred_check_branch
      %52 = sbr.rel (0) target = $region41
    $region40: #{gcn_policy_forward.1} parent=1 // pred_region
      _
    $region41: #{gcn_policy_forward.1} parent=1 // pred_fallthru
      _
    // Predicated region
    $region42: #{gcn_policy_forward.1} parent=1 // pred_check
      _
    $region43: #{gcn_policy_forward.1} parent=1 // pred_check_branch
      %54 = sbr.rel (0) target = $region45
    $region44: #{gcn_policy_forward.1} parent=1 // pred_region
      _
    $region45: #{gcn_policy_forward.1} parent=1 // pred_fallthru
      _
    // Predicated region
    $region46: #{gcn_policy_forward.1} parent=1 // pred_check
      _
    $region47: #{gcn_policy_forward.1} parent=1 // pred_check_branch
      %56 = sbr.rel (0) target = $region49
    $region48: #{gcn_policy_forward.1} parent=1 // pred_region
      _
    $region49: #{gcn_policy_forward.1} parent=1 // pred_fallthru
      _
    // Predicated region
    $region50: #{gcn_policy_forward.1} parent=1 // pred_check
      _
    $region51: #{gcn_policy_forward.1} parent=1 // pred_check_branch
      %58 = sbr.rel (0) target = $region53
    $region52: #{gcn_policy_forward.1} parent=1 // pred_region
      _
    $region53: #{gcn_policy_forward.1} parent=1 // pred_fallthru
      _
    // Predicated region
    $region54: #{gcn_policy_forward.1} parent=1 // pred_check
      _
    $region55: #{gcn_policy_forward.1} parent=1 // pred_check_branch
      %60 = sbr.rel (0) target = $region57
    $region56: #{gcn_policy_forward.1} parent=1 // pred_region
      _
    $region57: #{gcn_policy_forward.1} parent=1 // pred_fallthru
      _
    // Predicated region
    $region58: #{gcn_policy_forward.1} parent=1 // pred_check
      _
    $region59: #{gcn_policy_forward.1} parent=1 // pred_check_branch
      %62 = sbr.rel (0) target = $region61
    $region60: #{gcn_policy_forward.1} parent=1 // pred_region
      _
    $region61: #{gcn_policy_forward.1} parent=1 // pred_fallthru
      _
    // Predicated region
    $region62: #{gcn_policy_forward.1} parent=1 // pred_check
      _
    $region63: #{gcn_policy_forward.1} parent=1 // pred_check_branch
      %64 = sbr.rel (0) target = $region65
    $region64: #{gcn_policy_forward.1} parent=1 // pred_region
      _
    $region65: #{gcn_policy_forward.1} parent=1 // pred_fallthru
      _
    // Predicated region
    $region66: #{gcn_policy_forward.1} parent=1 // pred_check
      _
    $region67: #{gcn_policy_forward.1} parent=1 // pred_check_branch
      %66 = sbr.rel (0) target = $region69
    $region68: #{gcn_policy_forward.1} parent=1 // pred_region
      _
    $region69: #{gcn_policy_forward.1} parent=1 // pred_fallthru
      _
    // Predicated region
    $region70: #{gcn_policy_forward.1} parent=1 // pred_check
      _
    $region71: #{gcn_policy_forward.1} parent=1 // pred_check_branch
      %68 = sbr.rel (0) target = $region73
    $region72: #{gcn_policy_forward.1} parent=1 // pred_region
      _
    $region73: #{gcn_policy_forward.1} parent=1 // pred_fallthru
      _
    // Predicated region
    $region74: #{gcn_policy_forward.1} parent=1 // pred_check
      _
    $region75: #{gcn_policy_forward.1} parent=1 // pred_check_branch
      %70 = sbr.rel (0) target = $region77
    $region76: #{gcn_policy_forward.1} parent=1 // pred_region
      _
    $region77: #{gcn_policy_forward.1} parent=1 // pred_fallthru
      _
    // Predicated region
    $region78: #{gcn_policy_forward.1} parent=1 // pred_check
      _
    $region79: #{gcn_policy_forward.1} parent=1 // pred_check_branch
      %72 = sbr.rel (0) target = $region81
    $region80: #{gcn_policy_forward.1} parent=1 // pred_region
      _
    $region81: #{gcn_policy_forward.1} parent=1 // pred_fallthru
      _
    // Predicated region
    $region82: #{gcn_policy_forward.1} parent=1 // pred_check
      _
    $region83: #{gcn_policy_forward.1} parent=1 // pred_check_branch
      %74 = sbr.rel (0) target = $region85
    $region84: #{gcn_policy_forward.1} parent=1 // pred_region
      %76 = vsyncadd [#allocation4], 0
      %s78 = sshll.u32 %s20, 4
      %s79 = int_to_ptr.vmem [resolvable:$true] %s78
      %81 = dma.vmem_to_smem %s79, 16, [#allocation3], [#allocation4]
    $region85: #{gcn_policy_forward.1} parent=1 // pred_fallthru
      _
    // Predicated region
    $region86: #{gcn_policy_forward.1} parent=1 // pred_check
      _
    $region87: #{gcn_policy_forward.1} parent=1 // pred_check_branch
      %83 = sbr.rel (0) target = $region89
    $region88: #{gcn_policy_forward.1} parent=1 // pred_region
      %85 = vsyncadd [#allocation6], 0
      %s87 = sshll.u32 %s21, 4
      %s88 = int_to_ptr.vmem [resolvable:$true] %s87
      %90 = dma.vmem_to_smem %s88, 16, [#allocation5], [#allocation6]
    $region89: #{gcn_policy_forward.1} parent=1 // pred_fallthru
      _
    // Predicated region
    $region90: #{gcn_policy_forward.1} parent=1 // pred_check
      _
    $region91: #{gcn_policy_forward.1} parent=1 // pred_check_branch
      %92 = sbr.rel (0) target = $region93
    $region92: #{gcn_policy_forward.1} parent=1 // pred_region
      _
    $region93: #{gcn_policy_forward.1} parent=1 // pred_fallthru
      _
    // Predicated region
    $region94: #{gcn_policy_forward.1} parent=1 // pred_check
      _
    $region95: #{gcn_policy_forward.1} parent=1 // pred_check_branch
      %94 = sbr.rel (0) target = $region97
    $region96: #{gcn_policy_forward.1} parent=1 // pred_region
      %96 = dma.done [#allocation4], 16
    $region97: #{gcn_policy_forward.1} parent=1 // pred_fallthru
      _
    // Predicated region
    $region98: #{gcn_policy_forward.1} parent=1 // pred_check
      _
    $region99: #{gcn_policy_forward.1} parent=1 // pred_check_branch
      %98 = sbr.rel (0) target = $region101
    $region100: #{gcn_policy_forward.1} parent=1 // pred_region
      %100 = dma.done [#allocation6], 16
    $region101: #{gcn_policy_forward.1} parent=1 // pred_fallthru
      _
    %101 = sfence
    %v103 = vld [vmem:[%s0] sm:$0xff]
    %v104 = vld [vmem:[%s0 + $0x8] sm:$0xff]
    %v105 = vld [vmem:[%s1] sm:$0xff]
    %v106 = vld [vmem:[%s1 + $0x8] sm:$0xff]
    %v107 = vld [vmem:[%s1 + $0x10] sm:$0xff]
    %v108 = vld [vmem:[%s2] sm:$0xf]
    %v109 = vld [vmem:[%s2 + $0x4] sm:$0xf]
    %v110 = vld [vmem:[%s3] sm:$0xf]
    %v111 = vld [vmem:[%s3 + $0x4] sm:$0xf]
    %v112 = vld [vmem:[%s3 + $0x8] sm:$0xf]
    %s113 = sld [smem:[#allocation2]]
    %v114 = vld [vmem:[%s4] sm:$0xff]
    %v115 = vld [vmem:[%s4 + $0x8] sm:$0xff]
    %v116 = vld [vmem:[%s4 + $0x10] sm:$0xff]
    %118 = vset.pattern.permute.xlu0 0
    %119 = vperm.xlu0 %118, %v114
    %v120 = vpop.permute.xlu0 %119
    %123 = vset.pattern.permute.xlu0 0
    %124 = vperm.xlu0 %123, %v115
    %v125 = vpop.permute.xlu0 %124
    %128 = vset.pattern.permute.xlu0 0
    %129 = vperm.xlu0 %128, %v116
    %v130 = vpop.permute.xlu0 %129
    %v132 = vld [vmem:[%s5] sm:$0xff]
    %v133 = vld [vmem:[%s5 + $0x8] sm:$0xff]
    %135 = vset.pattern.permute.xlu0 0
    %136 = vperm.xlu0 %135, %v132
    %v137 = vpop.permute.xlu0 %136
    %140 = vset.pattern.permute.xlu0 0
    %141 = vperm.xlu0 %140, %v133
    %v142 = vpop.permute.xlu0 %141
    %v144 = vpack.c.bf16 %v104, %v103
    %v148 = vunpack.c.l.b16 %v110
    %v149 = vunpack.c.l.b16 %v111
    %v150 = vunpack.c.l.b16 %v112
    %v151 = vpack.c.b16 %v149, %v148
    %v152 = vpack.c.b16 %v150, %v150
    %vm153 = vcmask 130048
    %v155 = vsel %vm153, %v151, 0
    %v158 = vsel %vm153, %v152, 0
    %160 = vmatpush.bf16.msra.mxu0 0
    %161 = vmatpush.bf16.msra.mxu0 0
    %162 = vmatpush.bf16.msra.mxu0 0
    %163 = vmatpush.bf16.msra.mxu0 0
    %164 = vmatpush.bf16.msra.mxu0 0
    %165 = vmatpush.bf16.msra.mxu0 0
    %166 = vmatpush.bf16.msra.mxu0 0
    %167 = vmatpush.bf16.msra.mxu0 %v144
    %168 = vmatmul.bf16.gmra.mxu0 %v155
    %v169 = vpop.f32.mrf.mxu0
    %v170 = vadd.f32 0.0, %v169
    %v171 = vpop.f32.mrf.mxu0
    %v172 = vadd.f32 0.0, %v171
    %173 = vmatmul.bf16.gmra.mxu0 %v158
    %v174 = vpop.f32.mrf.mxu0
    %v175 = vadd.f32 0.0, %v174
    %v176 = vpop.f32.mrf.mxu0
    %177 = vdwg.mxu0
    %v178 = vstv %s113
    %v179 = vmul.f32 %v170, %v178
    %v180 = vmul.f32 %v172, %v178
    %v181 = vmul.f32 %v175, %v178
    %s182 = sld [smem:[#allocation3]]
    %v183 = vsub.f32 %v120, %v179
    %v184 = vsub.f32 %v125, %v180
    %v185 = vsub.f32 %v130, %v181
    %v186 = vstv %s182
    %v187 = vmul.f32 %v186, %v183
    %v188 = vmul.f32 %v186, %v184
    %v189 = vmul.f32 %v186, %v185
    %v190 = vadd.f32 %v105, %v187
    %v191 = vadd.f32 %v106, %v188
    %v192 = vadd.f32 %v107, %v189
    %v193 = vpack.c.bf16 %v191, %v190
    %v194 = vpack.c.bf16 %v192, %v192
    %v195 = vld [vmem:[%s6] sm:$0xf]
    %v196 = vld [vmem:[%s6 + $0x4] sm:$0xf]
    %v197 = vld [vmem:[%s6 + $0x8] sm:$0xf]
    %v198 = vld [vmem:[%s6 + $0xc] sm:$0xf]
    %v199 = vld [vmem:[%s6 + $0x10] sm:$0xf]
    %v200 = vld [vmem:[%s6 + $0x14] sm:$0xf]
    %v201 = vld [vmem:[%s6 + $0x18] sm:$0xf]
    %v202 = vld [vmem:[%s6 + $0x1c] sm:$0xf]
    %v203 = vld [vmem:[%s6 + $0x20] sm:$0xf]
    %v204 = vld [vmem:[%s6 + $0x24] sm:$0xf]
    %v205 = vld [vmem:[%s6 + $0x28] sm:$0xf]
    %v206 = vld [vmem:[%s6 + $0x2c] sm:$0xf]
    %v207 = vld [vmem:[%s6 + $0x30] sm:$0xf]
    %v208 = vld [vmem:[%s6 + $0x34] sm:$0xf]
    %v209 = vld [vmem:[%s6 + $0x38] sm:$0xf]
    %v210 = vld [vmem:[%s6 + $0x3c] sm:$0xf]
    %v211 = vld [vmem:[%s7] sm:$0x1]
    %v213 = vperm.slane %v211, 0
    %v231 = vunpack.c.l.b16 %v195
    %v232 = vunpack.c.l.b16 %v196
    %v233 = vunpack.c.l.b16 %v197
    %v234 = vunpack.c.l.b16 %v198
    %v235 = vunpack.c.l.b16 %v199
    %v236 = vunpack.c.l.b16 %v200
    %v237 = vunpack.c.l.b16 %v201
    %v238 = vunpack.c.l.b16 %v202
    %v239 = vunpack.c.l.b16 %v203
    %v240 = vunpack.c.l.b16 %v204
    %v241 = vunpack.c.l.b16 %v205
    %v242 = vunpack.c.l.b16 %v206
    %v243 = vunpack.c.l.b16 %v207
    %v244 = vunpack.c.l.b16 %v208
    %v245 = vunpack.c.l.b16 %v209
    %v246 = vunpack.c.l.b16 %v210
    %v247 = vpack.c.b16 %v232, %v231
    %v248 = vpack.c.b16 %v234, %v233
    %v249 = vpack.c.b16 %v236, %v235
    %v250 = vpack.c.b16 %v238, %v237
    %v251 = vpack.c.b16 %v240, %v239
    %v252 = vpack.c.b16 %v242, %v241
    %v253 = vpack.c.b16 %v244, %v243
    %v254 = vpack.c.b16 %v246, %v245
    %263 = vmatpush.bf16.msra.mxu0 %v254
    %264 = vmatpush.bf16.msra.mxu0 %v253
    %265 = vmatpush.bf16.msra.mxu0 %v252
    %266 = vmatpush.bf16.msra.mxu0 %v251
    %267 = vmatpush.bf16.msra.mxu0 %v250
    %268 = vmatpush.bf16.msra.mxu0 %v249
    %269 = vmatpush.bf16.msra.mxu0 %v248
    %270 = vmatpush.bf16.msra.mxu0 %v247
    %271 = vmatmul.bf16.gmra.mxu0 %v193
    %v272 = vpop.f32.mrf.mxu0
    %v273 = vadd.f32 %v213, %v272
    %v274 = vpop.f32.mrf.mxu0
    %v275 = vadd.f32 %v213, %v274
    %276 = vmatmul.bf16.gmra.mxu0 %v194
    %v277 = vpop.f32.mrf.mxu0
    %v278 = vadd.f32 %v213, %v277
    %v279 = vpop.f32.mrf.mxu0
    %280 = vdwg.mxu0
    %v281 = vmax.f32 %v273, 0.0
    %v282 = vmax.f32 %v275, 0.0
    %v283 = vmax.f32 %v278, 0.0
    %v284 = vpack.c.bf16 %v282, %v281
    %v285 = vpack.c.bf16 %v283, %v283
    %v286 = vld [vmem:[%s8] sm:$0xf]
    %v287 = vld [vmem:[%s8 + $0x4] sm:$0xf]
    %v288 = vld [vmem:[%s8 + $0x8] sm:$0xf]
    %v289 = vld [vmem:[%s8 + $0xc] sm:$0xf]
    %v290 = vld [vmem:[%s8 + $0x10] sm:$0xf]
    %v291 = vld [vmem:[%s8 + $0x14] sm:$0xf]
    %v292 = vld [vmem:[%s8 + $0x18] sm:$0xf]
    %v293 = vld [vmem:[%s8 + $0x1c] sm:$0xf]
    %v294 = vld [vmem:[%s8 + $0x20] sm:$0xf]
    %v295 = vld [vmem:[%s8 + $0x24] sm:$0xf]
    %v296 = vld [vmem:[%s8 + $0x28] sm:$0xf]
    %v297 = vld [vmem:[%s8 + $0x2c] sm:$0xf]
    %v298 = vld [vmem:[%s8 + $0x30] sm:$0xf]
    %v299 = vld [vmem:[%s8 + $0x34] sm:$0xf]
    %v300 = vld [vmem:[%s8 + $0x38] sm:$0xf]
    %v301 = vld [vmem:[%s8 + $0x3c] sm:$0xf]
    %v302 = vld [vmem:[%s9] sm:$0x1]
    %v304 = vperm.slane %v302, 0
    %v322 = vunpack.c.l.b16 %v286
    %v323 = vunpack.c.l.b16 %v287
    %v324 = vunpack.c.l.b16 %v288
    %v325 = vunpack.c.l.b16 %v289
    %v326 = vunpack.c.l.b16 %v290
    %v327 = vunpack.c.l.b16 %v291
    %v328 = vunpack.c.l.b16 %v292
    %v329 = vunpack.c.l.b16 %v293
    %v330 = vunpack.c.l.b16 %v294
    %v331 = vunpack.c.l.b16 %v295
    %v332 = vunpack.c.l.b16 %v296
    %v333 = vunpack.c.l.b16 %v297
    %v334 = vunpack.c.l.b16 %v298
    %v335 = vunpack.c.l.b16 %v299
    %v336 = vunpack.c.l.b16 %v300
    %v337 = vunpack.c.l.b16 %v301
    %v338 = vpack.c.b16 %v323, %v322
    %v339 = vpack.c.b16 %v325, %v324
    %v340 = vpack.c.b16 %v327, %v326
    %v341 = vpack.c.b16 %v329, %v328
    %v342 = vpack.c.b16 %v331, %v330
    %v343 = vpack.c.b16 %v333, %v332
    %v344 = vpack.c.b16 %v335, %v334
    %v345 = vpack.c.b16 %v337, %v336
    %354 = vmatpush.bf16.msra.mxu0 %v345
    %355 = vmatpush.bf16.msra.mxu0 %v344
    %356 = vmatpush.bf16.msra.mxu0 %v343
    %357 = vmatpush.bf16.msra.mxu0 %v342
    %358 = vmatpush.bf16.msra.mxu0 %v341
    %359 = vmatpush.bf16.msra.mxu0 %v340
    %360 = vmatpush.bf16.msra.mxu0 %v339
    %361 = vmatpush.bf16.msra.mxu0 %v338
    %362 = vmatmul.bf16.gmra.mxu0 %v284
    %v363 = vpop.f32.mrf.mxu0
    %v364 = vadd.f32 %v304, %v363
    %v365 = vpop.f32.mrf.mxu0
    %v366 = vadd.f32 %v304, %v365
    %367 = vmatmul.bf16.gmra.mxu0 %v285
    %v368 = vpop.f32.mrf.mxu0
    %v369 = vadd.f32 %v304, %v368
    %v370 = vpop.f32.mrf.mxu0
    %371 = vdwg.mxu0
    %v372 = vmax.f32 %v364, 0.0
    %v373 = vmax.f32 %v366, 0.0
    %v374 = vmax.f32 %v369, 0.0
    %v375 = vmul.f32 %v372, 2.0
    %v376 = vmul.f32 %v373, 2.0
    %v377 = vmul.f32 %v374, 2.0
    %v378 = vsub.f32 %v375, %v105
    %v379 = vsub.f32 %v376, %v106
    %v380 = vsub.f32 %v377, %v107
    %v381 = vpack.c.bf16 %v379, %v378
    %v382 = vpack.c.bf16 %v380, %v380
    %v385 = vunpack.c.l.b16 %v108
    %v386 = vunpack.c.l.b16 %v109
    %v387 = vpack.c.b16 %v386, %v385
    %vm388 = vcmask 195584
    %v390 = vsel %vm388, %v387, 0
    %vm392 = vcmask 1043456
    %v394 = vsel %vm392, %v382, 0
    %396 = vmatpush.bf16.msra.mxu0 0
    %397 = vmatpush.bf16.msra.mxu0 0
    %398 = vmatpush.bf16.msra.mxu0 0
    %399 = vmatpush.bf16.msra.mxu0 0
    %400 = vmatpush.bf16.msra.mxu0 0
    %401 = vmatpush.bf16.msra.mxu0 0
    %402 = vmatpush.bf16.msra.mxu0 %v394
    %403 = vmatpush.bf16.msra.mxu0 %v381
    %404 = vmatmul.bf16.gmra.mxu0 %v390
    %v405 = vpop.f32.mrf.mxu0
    %v406 = vadd.f32 0.0, %v405
    %v407 = vpop.f32.mrf.mxu0
    %v408 = vadd.f32 0.0, %v407
    %409 = vdwg.mxu0
    %v410 = vmul.f32 %v406, %v178
    %v411 = vmul.f32 %v408, %v178
    %s412 = sld [smem:[#allocation5]]
    %v413 = vsub.f32 %v137, %v410
    %v414 = vsub.f32 %v142, %v411
    %v415 = vstv %s412
    %v416 = vmul.f32 %v415, %v413
    %v417 = vmul.f32 %v415, %v414
    %v418 = vsub.f32 %v103, %v416
    %v419 = vsub.f32 %v104, %v417
    %v420 = vpack.c.bf16 %v419, %v418
    %v421 = vld [vmem:[%s10] sm:$0xf]
    %v422 = vld [vmem:[%s10 + $0x4] sm:$0xf]
    %v423 = vld [vmem:[%s10 + $0x8] sm:$0xf]
    %v424 = vld [vmem:[%s10 + $0xc] sm:$0xf]
    %v425 = vld [vmem:[%s10 + $0x10] sm:$0xf]
    %v426 = vld [vmem:[%s10 + $0x14] sm:$0xf]
    %v427 = vld [vmem:[%s10 + $0x18] sm:$0xf]
    %v428 = vld [vmem:[%s10 + $0x1c] sm:$0xf]
    %v429 = vld [vmem:[%s10 + $0x20] sm:$0xf]
    %v430 = vld [vmem:[%s10 + $0x24] sm:$0xf]
    %v431 = vld [vmem:[%s10 + $0x28] sm:$0xf]
    %v432 = vld [vmem:[%s10 + $0x2c] sm:$0xf]
    %v433 = vld [vmem:[%s10 + $0x30] sm:$0xf]
    %v434 = vld [vmem:[%s10 + $0x34] sm:$0xf]
    %v435 = vld [vmem:[%s10 + $0x38] sm:$0xf]
    %v436 = vld [vmem:[%s10 + $0x3c] sm:$0xf]
    %v437 = vld [vmem:[%s11] sm:$0x1]
    %v439 = vperm.slane %v437, 0
    %v457 = vunpack.c.l.b16 %v421
    %v458 = vunpack.c.l.b16 %v422
    %v459 = vunpack.c.l.b16 %v423
    %v460 = vunpack.c.l.b16 %v424
    %v461 = vunpack.c.l.b16 %v425
    %v462 = vunpack.c.l.b16 %v426
    %v463 = vunpack.c.l.b16 %v427
    %v464 = vunpack.c.l.b16 %v428
    %v465 = vunpack.c.l.b16 %v429
    %v466 = vunpack.c.l.b16 %v430
    %v467 = vunpack.c.l.b16 %v431
    %v468 = vunpack.c.l.b16 %v432
    %v469 = vunpack.c.l.b16 %v433
    %v470 = vunpack.c.l.b16 %v434
    %v471 = vunpack.c.l.b16 %v435
    %v472 = vunpack.c.l.b16 %v436
    %v473 = vpack.c.b16 %v458, %v457
    %v474 = vpack.c.b16 %v460, %v459
    %v475 = vpack.c.b16 %v462, %v461
    %v476 = vpack.c.b16 %v464, %v463
    %v477 = vpack.c.b16 %v466, %v465
    %v478 = vpack.c.b16 %v468, %v467
    %v479 = vpack.c.b16 %v470, %v469
    %v480 = vpack.c.b16 %v472, %v471
    %489 = vmatpush.bf16.msra.mxu0 %v480
    %490 = vmatpush.bf16.msra.mxu0 %v479
    %491 = vmatpush.bf16.msra.mxu0 %v478
    %492 = vmatpush.bf16.msra.mxu0 %v477
    %493 = vmatpush.bf16.msra.mxu0 %v476
    %494 = vmatpush.bf16.msra.mxu0 %v475
    %495 = vmatpush.bf16.msra.mxu0 %v474
    %496 = vmatpush.bf16.msra.mxu0 %v473
    %497 = vmatmul.bf16.gmra.mxu0 %v420
    %v498 = vpop.f32.mrf.mxu0
    %v499 = vadd.f32 %v439, %v498
    %v500 = vpop.f32.mrf.mxu0
    %v501 = vadd.f32 %v439, %v500
    %502 = vdwg.mxu0
    %v503 = vmax.f32 %v499, 0.0
    %v504 = vmax.f32 %v501, 0.0
    %v505 = vpack.c.bf16 %v504, %v503
    %v506 = vld [vmem:[%s12] sm:$0xf]
    %v507 = vld [vmem:[%s12 + $0x4] sm:$0xf]
    %v508 = vld [vmem:[%s12 + $0x8] sm:$0xf]
    %v509 = vld [vmem:[%s12 + $0xc] sm:$0xf]
    %v510 = vld [vmem:[%s12 + $0x10] sm:$0xf]
    %v511 = vld [vmem:[%s12 + $0x14] sm:$0xf]
    %v512 = vld [vmem:[%s12 + $0x18] sm:$0xf]
    %v513 = vld [vmem:[%s12 + $0x1c] sm:$0xf]
    %v514 = vld [vmem:[%s12 + $0x20] sm:$0xf]
    %v515 = vld [vmem:[%s12 + $0x24] sm:$0xf]
    %v516 = vld [vmem:[%s12 + $0x28] sm:$0xf]
    %v517 = vld [vmem:[%s12 + $0x2c] sm:$0xf]
    %v518 = vld [vmem:[%s12 + $0x30] sm:$0xf]
    %v519 = vld [vmem:[%s12 + $0x34] sm:$0xf]
    %v520 = vld [vmem:[%s12 + $0x38] sm:$0xf]
    %v521 = vld [vmem:[%s12 + $0x3c] sm:$0xf]
    %v522 = vld [vmem:[%s13] sm:$0x1]
    %v524 = vperm.slane %v522, 0
    %v542 = vunpack.c.l.b16 %v506
    %v543 = vunpack.c.l.b16 %v507
    %v544 = vunpack.c.l.b16 %v508
    %v545 = vunpack.c.l.b16 %v509
    %v546 = vunpack.c.l.b16 %v510
    %v547 = vunpack.c.l.b16 %v511
    %v548 = vunpack.c.l.b16 %v512
    %v549 = vunpack.c.l.b16 %v513
    %v550 = vunpack.c.l.b16 %v514
    %v551 = vunpack.c.l.b16 %v515
    %v552 = vunpack.c.l.b16 %v516
    %v553 = vunpack.c.l.b16 %v517
    %v554 = vunpack.c.l.b16 %v518
    %v555 = vunpack.c.l.b16 %v519
    %v556 = vunpack.c.l.b16 %v520
    %v557 = vunpack.c.l.b16 %v521
    %v558 = vpack.c.b16 %v543, %v542
    %v559 = vpack.c.b16 %v545, %v544
    %v560 = vpack.c.b16 %v547, %v546
    %v561 = vpack.c.b16 %v549, %v548
    %v562 = vpack.c.b16 %v551, %v550
    %v563 = vpack.c.b16 %v553, %v552
    %v564 = vpack.c.b16 %v555, %v554
    %v565 = vpack.c.b16 %v557, %v556
    %574 = vmatpush.bf16.msra.mxu0 %v565
    %575 = vmatpush.bf16.msra.mxu0 %v564
    %576 = vmatpush.bf16.msra.mxu0 %v563
    %577 = vmatpush.bf16.msra.mxu0 %v562
    %578 = vmatpush.bf16.msra.mxu0 %v561
    %579 = vmatpush.bf16.msra.mxu0 %v560
    %580 = vmatpush.bf16.msra.mxu0 %v559
    %581 = vmatpush.bf16.msra.mxu0 %v558
    %582 = vmatmul.bf16.gmra.mxu0 %v505
    %v583 = vpop.f32.mrf.mxu0
    %v584 = vadd.f32 %v524, %v583
    %v585 = vpop.f32.mrf.mxu0
    %v586 = vadd.f32 %v524, %v585
    %587 = vdwg.mxu0
    %v588 = vmax.f32 %v584, 0.0
    %v589 = vmax.f32 %v586, 0.0
    %v590 = vpack.c.bf16 %v589, %v588
    %591 = vmatpush.bf16.msra.mxu0 0
    %592 = vmatpush.bf16.msra.mxu0 0
    %593 = vmatpush.bf16.msra.mxu0 0
    %594 = vmatpush.bf16.msra.mxu0 0
    %595 = vmatpush.bf16.msra.mxu0 0
    %596 = vmatpush.bf16.msra.mxu0 0
    %597 = vmatpush.bf16.msra.mxu0 0
    %598 = vmatpush.bf16.msra.mxu0 %v590
    %599 = vmatmul.bf16.gmra.mxu0 %v155
    %v600 = vpop.f32.mrf.mxu0
    %v601 = vadd.f32 0.0, %v600
    %v602 = vpop.f32.mrf.mxu0
    %v603 = vadd.f32 0.0, %v602
    %604 = vmatmul.bf16.gmra.mxu0 %v158
    %v605 = vpop.f32.mrf.mxu0
    %v606 = vadd.f32 0.0, %v605
    %v607 = vpop.f32.mrf.mxu0
    %608 = vdwg.mxu0
    %v609 = vmul.f32 %v601, %v178
    %v610 = vmul.f32 %v603, %v178
    %v611 = vmul.f32 %v606, %v178
    %s612 = sld [smem:[#allocation3 + $0x1]]
    %v613 = vsub.f32 %v120, %v609
    %v614 = vsub.f32 %v125, %v610
    %v615 = vsub.f32 %v130, %v611
    %v616 = vstv %s612
    %v617 = vmul.f32 %v616, %v613
    %v618 = vmul.f32 %v616, %v614
    %v619 = vmul.f32 %v616, %v615
    %v620 = vadd.f32 %v372, %v617
    %v621 = vadd.f32 %v373, %v618
    %v622 = vadd.f32 %v374, %v619
    %v623 = vpack.c.bf16 %v621, %v620
    %v624 = vpack.c.bf16 %v622, %v622
    %s625 = scalar_lea.vmem %s6, 64
    %v626 = vld [vmem:[%s625] sm:$0xf]
    %v627 = vld [vmem:[%s625 + $0x4] sm:$0xf]
    %v628 = vld [vmem:[%s625 + $0x8] sm:$0xf]
    %v629 = vld [vmem:[%s625 + $0xc] sm:$0xf]
    %v630 = vld [vmem:[%s625 + $0x10] sm:$0xf]
    %v631 = vld [vmem:[%s625 + $0x14] sm:$0xf]
    %v632 = vld [vmem:[%s625 + $0x18] sm:$0xf]
    %v633 = vld [vmem:[%s625 + $0x1c] sm:$0xf]
    %v634 = vld [vmem:[%s625 + $0x20] sm:$0xf]
    %v635 = vld [vmem:[%s625 + $0x24] sm:$0xf]
    %v636 = vld [vmem:[%s625 + $0x28] sm:$0xf]
    %v637 = vld [vmem:[%s625 + $0x2c] sm:$0xf]
    %v638 = vld [vmem:[%s625 + $0x30] sm:$0xf]
    %v639 = vld [vmem:[%s625 + $0x34] sm:$0xf]
    %v640 = vld [vmem:[%s625 + $0x38] sm:$0xf]
    %v641 = vld [vmem:[%s625 + $0x3c] sm:$0xf]
    %s642 = scalar_lea.vmem %s7, 1
    %v643 = vld [vmem:[%s642] sm:$0x1]
    %v645 = vperm.slane %v643, 0
    %v663 = vunpack.c.l.b16 %v626
    %v664 = vunpack.c.l.b16 %v627
    %v665 = vunpack.c.l.b16 %v628
    %v666 = vunpack.c.l.b16 %v629
    %v667 = vunpack.c.l.b16 %v630
    %v668 = vunpack.c.l.b16 %v631
    %v669 = vunpack.c.l.b16 %v632
    %v670 = vunpack.c.l.b16 %v633
    %v671 = vunpack.c.l.b16 %v634
    %v672 = vunpack.c.l.b16 %v635
    %v673 = vunpack.c.l.b16 %v636
    %v674 = vunpack.c.l.b16 %v637
    %v675 = vunpack.c.l.b16 %v638
    %v676 = vunpack.c.l.b16 %v639
    %v677 = vunpack.c.l.b16 %v640
    %v678 = vunpack.c.l.b16 %v641
    %v679 = vpack.c.b16 %v664, %v663
    %v680 = vpack.c.b16 %v666, %v665
    %v681 = vpack.c.b16 %v668, %v667
    %v682 = vpack.c.b16 %v670, %v669
    %v683 = vpack.c.b16 %v672, %v671
    %v684 = vpack.c.b16 %v674, %v673
    %v685 = vpack.c.b16 %v676, %v675
    %v686 = vpack.c.b16 %v678, %v677
    %695 = vmatpush.bf16.msra.mxu0 %v686
    %696 = vmatpush.bf16.msra.mxu0 %v685
    %697 = vmatpush.bf16.msra.mxu0 %v684
    %698 = vmatpush.bf16.msra.mxu0 %v683
    %699 = vmatpush.bf16.msra.mxu0 %v682
    %700 = vmatpush.bf16.msra.mxu0 %v681
    %701 = vmatpush.bf16.msra.mxu0 %v680
    %702 = vmatpush.bf16.msra.mxu0 %v679
    %703 = vmatmul.bf16.gmra.mxu0 %v623
    %v704 = vpop.f32.mrf.mxu0
    %v705 = vadd.f32 %v645, %v704
    %v706 = vpop.f32.mrf.mxu0
    %v707 = vadd.f32 %v645, %v706
    %708 = vmatmul.bf16.gmra.mxu0 %v624
    %v709 = vpop.f32.mrf.mxu0
    %v710 = vadd.f32 %v645, %v709
    %v711 = vpop.f32.mrf.mxu0
    %712 = vdwg.mxu0
    %v713 = vmax.f32 %v705, 0.0
    %v714 = vmax.f32 %v707, 0.0
    %v715 = vmax.f32 %v710, 0.0
    %v716 = vpack.c.bf16 %v714, %v713
    %v717 = vpack.c.bf16 %v715, %v715
    %s718 = scalar_lea.vmem %s8, 64
    %v719 = vld [vmem:[%s718] sm:$0xf]
    %v720 = vld [vmem:[%s718 + $0x4] sm:$0xf]
    %v721 = vld [vmem:[%s718 + $0x8] sm:$0xf]
    %v722 = vld [vmem:[%s718 + $0xc] sm:$0xf]
    %v723 = vld [vmem:[%s718 + $0x10] sm:$0xf]
    %v724 = vld [vmem:[%s718 + $0x14] sm:$0xf]
    %v725 = vld [vmem:[%s718 + $0x18] sm:$0xf]
    %v726 = vld [vmem:[%s718 + $0x1c] sm:$0xf]
    %v727 = vld [vmem:[%s718 + $0x20] sm:$0xf]
    %v728 = vld [vmem:[%s718 + $0x24] sm:$0xf]
    %v729 = vld [vmem:[%s718 + $0x28] sm:$0xf]
    %v730 = vld [vmem:[%s718 + $0x2c] sm:$0xf]
    %v731 = vld [vmem:[%s718 + $0x30] sm:$0xf]
    %v732 = vld [vmem:[%s718 + $0x34] sm:$0xf]
    %v733 = vld [vmem:[%s718 + $0x38] sm:$0xf]
    %v734 = vld [vmem:[%s718 + $0x3c] sm:$0xf]
    %s735 = scalar_lea.vmem %s9, 1
    %v736 = vld [vmem:[%s735] sm:$0x1]
    %v738 = vperm.slane %v736, 0
    %v756 = vunpack.c.l.b16 %v719
    %v757 = vunpack.c.l.b16 %v720
    %v758 = vunpack.c.l.b16 %v721
    %v759 = vunpack.c.l.b16 %v722
    %v760 = vunpack.c.l.b16 %v723
    %v761 = vunpack.c.l.b16 %v724
    %v762 = vunpack.c.l.b16 %v725
    %v763 = vunpack.c.l.b16 %v726
    %v764 = vunpack.c.l.b16 %v727
    %v765 = vunpack.c.l.b16 %v728
    %v766 = vunpack.c.l.b16 %v729
    %v767 = vunpack.c.l.b16 %v730
    %v768 = vunpack.c.l.b16 %v731
    %v769 = vunpack.c.l.b16 %v732
    %v770 = vunpack.c.l.b16 %v733
    %v771 = vunpack.c.l.b16 %v734
    %v772 = vpack.c.b16 %v757, %v756
    %v773 = vpack.c.b16 %v759, %v758
    %v774 = vpack.c.b16 %v761, %v760
    %v775 = vpack.c.b16 %v763, %v762
    %v776 = vpack.c.b16 %v765, %v764
    %v777 = vpack.c.b16 %v767, %v766
    %v778 = vpack.c.b16 %v769, %v768
    %v779 = vpack.c.b16 %v771, %v770
    %788 = vmatpush.bf16.msra.mxu0 %v779
    %789 = vmatpush.bf16.msra.mxu0 %v778
    %790 = vmatpush.bf16.msra.mxu0 %v777
    %791 = vmatpush.bf16.msra.mxu0 %v776
    %792 = vmatpush.bf16.msra.mxu0 %v775
    %793 = vmatpush.bf16.msra.mxu0 %v774
    %794 = vmatpush.bf16.msra.mxu0 %v773
    %795 = vmatpush.bf16.msra.mxu0 %v772
    %796 = vmatmul.bf16.gmra.mxu0 %v716
    %v797 = vpop.f32.mrf.mxu0
    %v798 = vadd.f32 %v738, %v797
    %v799 = vpop.f32.mrf.mxu0
    %v800 = vadd.f32 %v738, %v799
    %801 = vmatmul.bf16.gmra.mxu0 %v717
    %v802 = vpop.f32.mrf.mxu0
    %v803 = vadd.f32 %v738, %v802
    %v804 = vpop.f32.mrf.mxu0
    %805 = vdwg.mxu0
    %v806 = vmax.f32 %v798, 0.0
    %v807 = vmax.f32 %v800, 0.0
    %v808 = vmax.f32 %v803, 0.0
    %v809 = vmul.f32 %v806, 2.0
    %v810 = vmul.f32 %v807, 2.0
    %v811 = vmul.f32 %v808, 2.0
    %v812 = vsub.f32 %v809, %v372
    %v813 = vsub.f32 %v810, %v373
    %v814 = vsub.f32 %v811, %v374
    %v815 = vpack.c.bf16 %v813, %v812
    %v816 = vpack.c.bf16 %v814, %v814
    %v818 = vsel %vm392, %v816, 0
    %820 = vmatpush.bf16.msra.mxu0 0
    %821 = vmatpush.bf16.msra.mxu0 0
    %822 = vmatpush.bf16.msra.mxu0 0
    %823 = vmatpush.bf16.msra.mxu0 0
    %824 = vmatpush.bf16.msra.mxu0 0
    %825 = vmatpush.bf16.msra.mxu0 0
    %826 = vmatpush.bf16.msra.mxu0 %v818
    %827 = vmatpush.bf16.msra.mxu0 %v815
    %828 = vmatmul.bf16.gmra.mxu0 %v390
    %v829 = vpop.f32.mrf.mxu0
    %v830 = vadd.f32 0.0, %v829
    %v831 = vpop.f32.mrf.mxu0
    %v832 = vadd.f32 0.0, %v831
    %833 = vdwg.mxu0
    %v834 = vmul.f32 %v830, %v178
    %v835 = vmul.f32 %v832, %v178
    %s836 = sld [smem:[#allocation5 + $0x1]]
    %v837 = vsub.f32 %v137, %v834
    %v838 = vsub.f32 %v142, %v835
    %v839 = vstv %s836
    %v840 = vmul.f32 %v839, %v837
    %v841 = vmul.f32 %v839, %v838
    %v842 = vsub.f32 %v588, %v840
    %v843 = vsub.f32 %v589, %v841
    %v844 = vpack.c.bf16 %v843, %v842
    %s845 = scalar_lea.vmem %s10, 64
    %v846 = vld [vmem:[%s845] sm:$0xf]
    %v847 = vld [vmem:[%s845 + $0x4] sm:$0xf]
    %v848 = vld [vmem:[%s845 + $0x8] sm:$0xf]
    %v849 = vld [vmem:[%s845 + $0xc] sm:$0xf]
    %v850 = vld [vmem:[%s845 + $0x10] sm:$0xf]
    %v851 = vld [vmem:[%s845 + $0x14] sm:$0xf]
    %v852 = vld [vmem:[%s845 + $0x18] sm:$0xf]
    %v853 = vld [vmem:[%s845 + $0x1c] sm:$0xf]
    %v854 = vld [vmem:[%s845 + $0x20] sm:$0xf]
    %v855 = vld [vmem:[%s845 + $0x24] sm:$0xf]
    %v856 = vld [vmem:[%s845 + $0x28] sm:$0xf]
    %v857 = vld [vmem:[%s845 + $0x2c] sm:$0xf]
    %v858 = vld [vmem:[%s845 + $0x30] sm:$0xf]
    %v859 = vld [vmem:[%s845 + $0x34] sm:$0xf]
    %v860 = vld [vmem:[%s845 + $0x38] sm:$0xf]
    %v861 = vld [vmem:[%s845 + $0x3c] sm:$0xf]
    %s862 = scalar_lea.vmem %s11, 1
    %v863 = vld [vmem:[%s862] sm:$0x1]
    %v865 = vperm.slane %v863, 0
    %v883 = vunpack.c.l.b16 %v846
    %v884 = vunpack.c.l.b16 %v847
    %v885 = vunpack.c.l.b16 %v848
    %v886 = vunpack.c.l.b16 %v849
    %v887 = vunpack.c.l.b16 %v850
    %v888 = vunpack.c.l.b16 %v851
    %v889 = vunpack.c.l.b16 %v852
    %v890 = vunpack.c.l.b16 %v853
    %v891 = vunpack.c.l.b16 %v854
    %v892 = vunpack.c.l.b16 %v855
    %v893 = vunpack.c.l.b16 %v856
    %v894 = vunpack.c.l.b16 %v857
    %v895 = vunpack.c.l.b16 %v858
    %v896 = vunpack.c.l.b16 %v859
    %v897 = vunpack.c.l.b16 %v860
    %v898 = vunpack.c.l.b16 %v861
    %v899 = vpack.c.b16 %v884, %v883
    %v900 = vpack.c.b16 %v886, %v885
    %v901 = vpack.c.b16 %v888, %v887
    %v902 = vpack.c.b16 %v890, %v889
    %v903 = vpack.c.b16 %v892, %v891
    %v904 = vpack.c.b16 %v894, %v893
    %v905 = vpack.c.b16 %v896, %v895
    %v906 = vpack.c.b16 %v898, %v897
    %915 = vmatpush.bf16.msra.mxu0 %v906
    %916 = vmatpush.bf16.msra.mxu0 %v905
    %917 = vmatpush.bf16.msra.mxu0 %v904
    %918 = vmatpush.bf16.msra.mxu0 %v903
    %919 = vmatpush.bf16.msra.mxu0 %v902
    %920 = vmatpush.bf16.msra.mxu0 %v901
    %921 = vmatpush.bf16.msra.mxu0 %v900
    %922 = vmatpush.bf16.msra.mxu0 %v899
    %923 = vmatmul.bf16.gmra.mxu0 %v844
    %v924 = vpop.f32.mrf.mxu0
    %v925 = vadd.f32 %v865, %v924
    %v926 = vpop.f32.mrf.mxu0
    %v927 = vadd.f32 %v865, %v926
    %928 = vdwg.mxu0
    %v929 = vmax.f32 %v925, 0.0
    %v930 = vmax.f32 %v927, 0.0
    %v931 = vpack.c.bf16 %v930, %v929
    %s932 = scalar_lea.vmem %s12, 64
    %v933 = vld [vmem:[%s932] sm:$0xf]
    %v934 = vld [vmem:[%s932 + $0x4] sm:$0xf]
    %v935 = vld [vmem:[%s932 + $0x8] sm:$0xf]
    %v936 = vld [vmem:[%s932 + $0xc] sm:$0xf]
    %v937 = vld [vmem:[%s932 + $0x10] sm:$0xf]
    %v938 = vld [vmem:[%s932 + $0x14] sm:$0xf]
    %v939 = vld [vmem:[%s932 + $0x18] sm:$0xf]
    %v940 = vld [vmem:[%s932 + $0x1c] sm:$0xf]
    %v941 = vld [vmem:[%s932 + $0x20] sm:$0xf]
    %v942 = vld [vmem:[%s932 + $0x24] sm:$0xf]
    %v943 = vld [vmem:[%s932 + $0x28] sm:$0xf]
    %v944 = vld [vmem:[%s932 + $0x2c] sm:$0xf]
    %v945 = vld [vmem:[%s932 + $0x30] sm:$0xf]
    %v946 = vld [vmem:[%s932 + $0x34] sm:$0xf]
    %v947 = vld [vmem:[%s932 + $0x38] sm:$0xf]
    %v948 = vld [vmem:[%s932 + $0x3c] sm:$0xf]
    %s949 = scalar_lea.vmem %s13, 1
    %v950 = vld [vmem:[%s949] sm:$0x1]
    %v952 = vperm.slane %v950, 0
    %v970 = vunpack.c.l.b16 %v933
    %v971 = vunpack.c.l.b16 %v934
    %v972 = vunpack.c.l.b16 %v935
    %v973 = vunpack.c.l.b16 %v936
    %v974 = vunpack.c.l.b16 %v937
    %v975 = vunpack.c.l.b16 %v938
    %v976 = vunpack.c.l.b16 %v939
    %v977 = vunpack.c.l.b16 %v940
    %v978 = vunpack.c.l.b16 %v941
    %v979 = vunpack.c.l.b16 %v942
    %v980 = vunpack.c.l.b16 %v943
    %v981 = vunpack.c.l.b16 %v944
    %v982 = vunpack.c.l.b16 %v945
    %v983 = vunpack.c.l.b16 %v946
    %v984 = vunpack.c.l.b16 %v947
    %v985 = vunpack.c.l.b16 %v948
    %v986 = vpack.c.b16 %v971, %v970
    %v987 = vpack.c.b16 %v973, %v972
    %v988 = vpack.c.b16 %v975, %v974
    %v989 = vpack.c.b16 %v977, %v976
    %v990 = vpack.c.b16 %v979, %v978
    %v991 = vpack.c.b16 %v981, %v980
    %v992 = vpack.c.b16 %v983, %v982
    %v993 = vpack.c.b16 %v985, %v984
    %1002 = vmatpush.bf16.msra.mxu0 %v993
    %1003 = vmatpush.bf16.msra.mxu0 %v992
    %1004 = vmatpush.bf16.msra.mxu0 %v991
    %1005 = vmatpush.bf16.msra.mxu0 %v990
    %1006 = vmatpush.bf16.msra.mxu0 %v989
    %1007 = vmatpush.bf16.msra.mxu0 %v988
    %1008 = vmatpush.bf16.msra.mxu0 %v987
    %1009 = vmatpush.bf16.msra.mxu0 %v986
    %1010 = vmatmul.bf16.gmra.mxu0 %v931
    %v1011 = vpop.f32.mrf.mxu0
    %v1012 = vadd.f32 %v952, %v1011
    %v1013 = vpop.f32.mrf.mxu0
    %v1014 = vadd.f32 %v952, %v1013
    %1015 = vdwg.mxu0
    %v1016 = vmax.f32 %v1012, 0.0
    %v1017 = vmax.f32 %v1014, 0.0
    %v1018 = vpack.c.bf16 %v1017, %v1016
    %1019 = vmatpush.bf16.msra.mxu0 0
    %1020 = vmatpush.bf16.msra.mxu0 0
    %1021 = vmatpush.bf16.msra.mxu0 0
    %1022 = vmatpush.bf16.msra.mxu0 0
    %1023 = vmatpush.bf16.msra.mxu0 0
    %1024 = vmatpush.bf16.msra.mxu0 0
    %1025 = vmatpush.bf16.msra.mxu0 0
    %1026 = vmatpush.bf16.msra.mxu0 %v1018
    %1027 = vmatmul.bf16.gmra.mxu0 %v155
    %v1028 = vpop.f32.mrf.mxu0
    %v1029 = vadd.f32 0.0, %v1028
    %v1030 = vpop.f32.mrf.mxu0
    %v1031 = vadd.f32 0.0, %v1030
    %1032 = vmatmul.bf16.gmra.mxu0 %v158
    %v1033 = vpop.f32.mrf.mxu0
    %v1034 = vadd.f32 0.0, %v1033
    %v1035 = vpop.f32.mrf.mxu0
    %1036 = vdwg.mxu0
    %v1037 = vmul.f32 %v1029, %v178
    %v1038 = vmul.f32 %v1031, %v178
    %v1039 = vmul.f32 %v1034, %v178
    %s1040 = sld [smem:[#allocation3 + $0x2]]
    %v1041 = vsub.f32 %v120, %v1037
    %v1042 = vsub.f32 %v125, %v1038
    %v1043 = vsub.f32 %v130, %v1039
    %v1044 = vstv %s1040
    %v1045 = vmul.f32 %v1044, %v1041
    %v1046 = vmul.f32 %v1044, %v1042
    %v1047 = vmul.f32 %v1044, %v1043
    %v1048 = vadd.f32 %v806, %v1045
    %v1049 = vadd.f32 %v807, %v1046
    %v1050 = vadd.f32 %v808, %v1047
    %v1051 = vpack.c.bf16 %v1049, %v1048
    %v1052 = vpack.c.bf16 %v1050, %v1050
    %s1053 = scalar_lea.vmem %s6, 128
    %v1054 = vld [vmem:[%s1053] sm:$0xf]
    %v1055 = vld [vmem:[%s1053 + $0x4] sm:$0xf]
    %v1056 = vld [vmem:[%s1053 + $0x8] sm:$0xf]
    %v1057 = vld [vmem:[%s1053 + $0xc] sm:$0xf]
    %v1058 = vld [vmem:[%s1053 + $0x10] sm:$0xf]
    %v1059 = vld [vmem:[%s1053 + $0x14] sm:$0xf]
    %v1060 = vld [vmem:[%s1053 + $0x18] sm:$0xf]
    %v1061 = vld [vmem:[%s1053 + $0x1c] sm:$0xf]
    %v1062 = vld [vmem:[%s1053 + $0x20] sm:$0xf]
    %v1063 = vld [vmem:[%s1053 + $0x24] sm:$0xf]
    %v1064 = vld [vmem:[%s1053 + $0x28] sm:$0xf]
    %v1065 = vld [vmem:[%s1053 + $0x2c] sm:$0xf]
    %v1066 = vld [vmem:[%s1053 + $0x30] sm:$0xf]
    %v1067 = vld [vmem:[%s1053 + $0x34] sm:$0xf]
    %v1068 = vld [vmem:[%s1053 + $0x38] sm:$0xf]
    %v1069 = vld [vmem:[%s1053 + $0x3c] sm:$0xf]
    %s1070 = scalar_lea.vmem %s7, 2
    %v1071 = vld [vmem:[%s1070] sm:$0x1]
    %v1073 = vperm.slane %v1071, 0
    %v1091 = vunpack.c.l.b16 %v1054
    %v1092 = vunpack.c.l.b16 %v1055
    %v1093 = vunpack.c.l.b16 %v1056
    %v1094 = vunpack.c.l.b16 %v1057
    %v1095 = vunpack.c.l.b16 %v1058
    %v1096 = vunpack.c.l.b16 %v1059
    %v1097 = vunpack.c.l.b16 %v1060
    %v1098 = vunpack.c.l.b16 %v1061
    %v1099 = vunpack.c.l.b16 %v1062
    %v1100 = vunpack.c.l.b16 %v1063
    %v1101 = vunpack.c.l.b16 %v1064
    %v1102 = vunpack.c.l.b16 %v1065
    %v1103 = vunpack.c.l.b16 %v1066
    %v1104 = vunpack.c.l.b16 %v1067
    %v1105 = vunpack.c.l.b16 %v1068
    %v1106 = vunpack.c.l.b16 %v1069
    %v1107 = vpack.c.b16 %v1092, %v1091
    %v1108 = vpack.c.b16 %v1094, %v1093
    %v1109 = vpack.c.b16 %v1096, %v1095
    %v1110 = vpack.c.b16 %v1098, %v1097
    %v1111 = vpack.c.b16 %v1100, %v1099
    %v1112 = vpack.c.b16 %v1102, %v1101
    %v1113 = vpack.c.b16 %v1104, %v1103
    %v1114 = vpack.c.b16 %v1106, %v1105
    %1123 = vmatpush.bf16.msra.mxu0 %v1114
    %1124 = vmatpush.bf16.msra.mxu0 %v1113
    %1125 = vmatpush.bf16.msra.mxu0 %v1112
    %1126 = vmatpush.bf16.msra.mxu0 %v1111
    %1127 = vmatpush.bf16.msra.mxu0 %v1110
    %1128 = vmatpush.bf16.msra.mxu0 %v1109
    %1129 = vmatpush.bf16.msra.mxu0 %v1108
    %1130 = vmatpush.bf16.msra.mxu0 %v1107
    %1131 = vmatmul.bf16.gmra.mxu0 %v1051
    %v1132 = vpop.f32.mrf.mxu0
    %v1133 = vadd.f32 %v1073, %v1132
    %v1134 = vpop.f32.mrf.mxu0
    %v1135 = vadd.f32 %v1073, %v1134
    %1136 = vmatmul.bf16.gmra.mxu0 %v1052
    %v1137 = vpop.f32.mrf.mxu0
    %v1138 = vadd.f32 %v1073, %v1137
    %v1139 = vpop.f32.mrf.mxu0
    %1140 = vdwg.mxu0
    %v1141 = vmax.f32 %v1133, 0.0
    %v1142 = vmax.f32 %v1135, 0.0
    %v1143 = vmax.f32 %v1138, 0.0
    %v1144 = vpack.c.bf16 %v1142, %v1141
    %v1145 = vpack.c.bf16 %v1143, %v1143
    %s1146 = scalar_lea.vmem %s8, 128
    %v1147 = vld [vmem:[%s1146] sm:$0xf]
    %v1148 = vld [vmem:[%s1146 + $0x4] sm:$0xf]
    %v1149 = vld [vmem:[%s1146 + $0x8] sm:$0xf]
    %v1150 = vld [vmem:[%s1146 + $0xc] sm:$0xf]
    %v1151 = vld [vmem:[%s1146 + $0x10] sm:$0xf]
    %v1152 = vld [vmem:[%s1146 + $0x14] sm:$0xf]
    %v1153 = vld [vmem:[%s1146 + $0x18] sm:$0xf]
    %v1154 = vld [vmem:[%s1146 + $0x1c] sm:$0xf]
    %v1155 = vld [vmem:[%s1146 + $0x20] sm:$0xf]
    %v1156 = vld [vmem:[%s1146 + $0x24] sm:$0xf]
    %v1157 = vld [vmem:[%s1146 + $0x28] sm:$0xf]
    %v1158 = vld [vmem:[%s1146 + $0x2c] sm:$0xf]
    %v1159 = vld [vmem:[%s1146 + $0x30] sm:$0xf]
    %v1160 = vld [vmem:[%s1146 + $0x34] sm:$0xf]
    %v1161 = vld [vmem:[%s1146 + $0x38] sm:$0xf]
    %v1162 = vld [vmem:[%s1146 + $0x3c] sm:$0xf]
    %s1163 = scalar_lea.vmem %s9, 2
    %v1164 = vld [vmem:[%s1163] sm:$0x1]
    %v1166 = vperm.slane %v1164, 0
    %v1184 = vunpack.c.l.b16 %v1147
    %v1185 = vunpack.c.l.b16 %v1148
    %v1186 = vunpack.c.l.b16 %v1149
    %v1187 = vunpack.c.l.b16 %v1150
    %v1188 = vunpack.c.l.b16 %v1151
    %v1189 = vunpack.c.l.b16 %v1152
    %v1190 = vunpack.c.l.b16 %v1153
    %v1191 = vunpack.c.l.b16 %v1154
    %v1192 = vunpack.c.l.b16 %v1155
    %v1193 = vunpack.c.l.b16 %v1156
    %v1194 = vunpack.c.l.b16 %v1157
    %v1195 = vunpack.c.l.b16 %v1158
    %v1196 = vunpack.c.l.b16 %v1159
    %v1197 = vunpack.c.l.b16 %v1160
    %v1198 = vunpack.c.l.b16 %v1161
    %v1199 = vunpack.c.l.b16 %v1162
    %v1200 = vpack.c.b16 %v1185, %v1184
    %v1201 = vpack.c.b16 %v1187, %v1186
    %v1202 = vpack.c.b16 %v1189, %v1188
    %v1203 = vpack.c.b16 %v1191, %v1190
    %v1204 = vpack.c.b16 %v1193, %v1192
    %v1205 = vpack.c.b16 %v1195, %v1194
    %v1206 = vpack.c.b16 %v1197, %v1196
    %v1207 = vpack.c.b16 %v1199, %v1198
    %1216 = vmatpush.bf16.msra.mxu0 %v1207
    %1217 = vmatpush.bf16.msra.mxu0 %v1206
    %1218 = vmatpush.bf16.msra.mxu0 %v1205
    %1219 = vmatpush.bf16.msra.mxu0 %v1204
    %1220 = vmatpush.bf16.msra.mxu0 %v1203
    %1221 = vmatpush.bf16.msra.mxu0 %v1202
    %1222 = vmatpush.bf16.msra.mxu0 %v1201
    %1223 = vmatpush.bf16.msra.mxu0 %v1200
    %1224 = vmatmul.bf16.gmra.mxu0 %v1144
    %v1225 = vpop.f32.mrf.mxu0
    %v1226 = vadd.f32 %v1166, %v1225
    %v1227 = vpop.f32.mrf.mxu0
    %v1228 = vadd.f32 %v1166, %v1227
    %1229 = vmatmul.bf16.gmra.mxu0 %v1145
    %v1230 = vpop.f32.mrf.mxu0
    %v1231 = vadd.f32 %v1166, %v1230
    %v1232 = vpop.f32.mrf.mxu0
    %1233 = vdwg.mxu0
    %v1234 = vmax.f32 %v1226, 0.0
    %v1235 = vmax.f32 %v1228, 0.0
    %v1236 = vmax.f32 %v1231, 0.0
    %v1237 = vmul.f32 %v1234, 2.0
    %v1238 = vmul.f32 %v1235, 2.0
    %v1239 = vmul.f32 %v1236, 2.0
    %v1240 = vsub.f32 %v1237, %v806
    %v1241 = vsub.f32 %v1238, %v807
    %v1242 = vsub.f32 %v1239, %v808
    %v1243 = vpack.c.bf16 %v1241, %v1240
    %v1244 = vpack.c.bf16 %v1242, %v1242
    %v1246 = vsel %vm392, %v1244, 0
    %1248 = vmatpush.bf16.msra.mxu0 0
    %1249 = vmatpush.bf16.msra.mxu0 0
    %1250 = vmatpush.bf16.msra.mxu0 0
    %1251 = vmatpush.bf16.msra.mxu0 0
    %1252 = vmatpush.bf16.msra.mxu0 0
    %1253 = vmatpush.bf16.msra.mxu0 0
    %1254 = vmatpush.bf16.msra.mxu0 %v1246
    %1255 = vmatpush.bf16.msra.mxu0 %v1243
    %1256 = vmatmul.bf16.gmra.mxu0 %v390
    %v1257 = vpop.f32.mrf.mxu0
    %v1258 = vadd.f32 0.0, %v1257
    %v1259 = vpop.f32.mrf.mxu0
    %v1260 = vadd.f32 0.0, %v1259
    %1261 = vdwg.mxu0
    %v1262 = vmul.f32 %v1258, %v178
    %v1263 = vmul.f32 %v1260, %v178
    %s1264 = sld [smem:[#allocation5 + $0x2]]
    %v1265 = vsub.f32 %v137, %v1262
    %v1266 = vsub.f32 %v142, %v1263
    %v1267 = vstv %s1264
    %v1268 = vmul.f32 %v1267, %v1265
    %v1269 = vmul.f32 %v1267, %v1266
    %v1270 = vsub.f32 %v1016, %v1268
    %v1271 = vsub.f32 %v1017, %v1269
    %v1272 = vpack.c.bf16 %v1271, %v1270
    %s1273 = scalar_lea.vmem %s10, 128
    %v1274 = vld [vmem:[%s1273] sm:$0xf]
    %v1275 = vld [vmem:[%s1273 + $0x4] sm:$0xf]
    %v1276 = vld [vmem:[%s1273 + $0x8] sm:$0xf]
    %v1277 = vld [vmem:[%s1273 + $0xc] sm:$0xf]
    %v1278 = vld [vmem:[%s1273 + $0x10] sm:$0xf]
    %v1279 = vld [vmem:[%s1273 + $0x14] sm:$0xf]
    %v1280 = vld [vmem:[%s1273 + $0x18] sm:$0xf]
    %v1281 = vld [vmem:[%s1273 + $0x1c] sm:$0xf]
    %v1282 = vld [vmem:[%s1273 + $0x20] sm:$0xf]
    %v1283 = vld [vmem:[%s1273 + $0x24] sm:$0xf]
    %v1284 = vld [vmem:[%s1273 + $0x28] sm:$0xf]
    %v1285 = vld [vmem:[%s1273 + $0x2c] sm:$0xf]
    %v1286 = vld [vmem:[%s1273 + $0x30] sm:$0xf]
    %v1287 = vld [vmem:[%s1273 + $0x34] sm:$0xf]
    %v1288 = vld [vmem:[%s1273 + $0x38] sm:$0xf]
    %v1289 = vld [vmem:[%s1273 + $0x3c] sm:$0xf]
    %s1290 = scalar_lea.vmem %s11, 2
    %v1291 = vld [vmem:[%s1290] sm:$0x1]
    %v1293 = vperm.slane %v1291, 0
    %v1311 = vunpack.c.l.b16 %v1274
    %v1312 = vunpack.c.l.b16 %v1275
    %v1313 = vunpack.c.l.b16 %v1276
    %v1314 = vunpack.c.l.b16 %v1277
    %v1315 = vunpack.c.l.b16 %v1278
    %v1316 = vunpack.c.l.b16 %v1279
    %v1317 = vunpack.c.l.b16 %v1280
    %v1318 = vunpack.c.l.b16 %v1281
    %v1319 = vunpack.c.l.b16 %v1282
    %v1320 = vunpack.c.l.b16 %v1283
    %v1321 = vunpack.c.l.b16 %v1284
    %v1322 = vunpack.c.l.b16 %v1285
    %v1323 = vunpack.c.l.b16 %v1286
    %v1324 = vunpack.c.l.b16 %v1287
    %v1325 = vunpack.c.l.b16 %v1288
    %v1326 = vunpack.c.l.b16 %v1289
    %v1327 = vpack.c.b16 %v1312, %v1311
    %v1328 = vpack.c.b16 %v1314, %v1313
    %v1329 = vpack.c.b16 %v1316, %v1315
    %v1330 = vpack.c.b16 %v1318, %v1317
    %v1331 = vpack.c.b16 %v1320, %v1319
    %v1332 = vpack.c.b16 %v1322, %v1321
    %v1333 = vpack.c.b16 %v1324, %v1323
    %v1334 = vpack.c.b16 %v1326, %v1325
    %1343 = vmatpush.bf16.msra.mxu0 %v1334
    %1344 = vmatpush.bf16.msra.mxu0 %v1333
    %1345 = vmatpush.bf16.msra.mxu0 %v1332
    %1346 = vmatpush.bf16.msra.mxu0 %v1331
    %1347 = vmatpush.bf16.msra.mxu0 %v1330
    %1348 = vmatpush.bf16.msra.mxu0 %v1329
    %1349 = vmatpush.bf16.msra.mxu0 %v1328
    %1350 = vmatpush.bf16.msra.mxu0 %v1327
    %1351 = vmatmul.bf16.gmra.mxu0 %v1272
    %v1352 = vpop.f32.mrf.mxu0
    %v1353 = vadd.f32 %v1293, %v1352
    %v1354 = vpop.f32.mrf.mxu0
    %v1355 = vadd.f32 %v1293, %v1354
    %1356 = vdwg.mxu0
    %v1357 = vmax.f32 %v1353, 0.0
    %v1358 = vmax.f32 %v1355, 0.0
    %v1359 = vpack.c.bf16 %v1358, %v1357
    %s1360 = scalar_lea.vmem %s12, 128
    %v1361 = vld [vmem:[%s1360] sm:$0xf]
    %v1362 = vld [vmem:[%s1360 + $0x4] sm:$0xf]
    %v1363 = vld [vmem:[%s1360 + $0x8] sm:$0xf]
    %v1364 = vld [vmem:[%s1360 + $0xc] sm:$0xf]
    %v1365 = vld [vmem:[%s1360 + $0x10] sm:$0xf]
    %v1366 = vld [vmem:[%s1360 + $0x14] sm:$0xf]
    %v1367 = vld [vmem:[%s1360 + $0x18] sm:$0xf]
    %v1368 = vld [vmem:[%s1360 + $0x1c] sm:$0xf]
    %v1369 = vld [vmem:[%s1360 + $0x20] sm:$0xf]
    %v1370 = vld [vmem:[%s1360 + $0x24] sm:$0xf]
    %v1371 = vld [vmem:[%s1360 + $0x28] sm:$0xf]
    %v1372 = vld [vmem:[%s1360 + $0x2c] sm:$0xf]
    %v1373 = vld [vmem:[%s1360 + $0x30] sm:$0xf]
    %v1374 = vld [vmem:[%s1360 + $0x34] sm:$0xf]
    %v1375 = vld [vmem:[%s1360 + $0x38] sm:$0xf]
    %v1376 = vld [vmem:[%s1360 + $0x3c] sm:$0xf]
    %s1377 = scalar_lea.vmem %s13, 2
    %v1378 = vld [vmem:[%s1377] sm:$0x1]
    %v1380 = vperm.slane %v1378, 0
    %v1398 = vunpack.c.l.b16 %v1361
    %v1399 = vunpack.c.l.b16 %v1362
    %v1400 = vunpack.c.l.b16 %v1363
    %v1401 = vunpack.c.l.b16 %v1364
    %v1402 = vunpack.c.l.b16 %v1365
    %v1403 = vunpack.c.l.b16 %v1366
    %v1404 = vunpack.c.l.b16 %v1367
    %v1405 = vunpack.c.l.b16 %v1368
    %v1406 = vunpack.c.l.b16 %v1369
    %v1407 = vunpack.c.l.b16 %v1370
    %v1408 = vunpack.c.l.b16 %v1371
    %v1409 = vunpack.c.l.b16 %v1372
    %v1410 = vunpack.c.l.b16 %v1373
    %v1411 = vunpack.c.l.b16 %v1374
    %v1412 = vunpack.c.l.b16 %v1375
    %v1413 = vunpack.c.l.b16 %v1376
    %v1414 = vpack.c.b16 %v1399, %v1398
    %v1415 = vpack.c.b16 %v1401, %v1400
    %v1416 = vpack.c.b16 %v1403, %v1402
    %v1417 = vpack.c.b16 %v1405, %v1404
    %v1418 = vpack.c.b16 %v1407, %v1406
    %v1419 = vpack.c.b16 %v1409, %v1408
    %v1420 = vpack.c.b16 %v1411, %v1410
    %v1421 = vpack.c.b16 %v1413, %v1412
    %1430 = vmatpush.bf16.msra.mxu0 %v1421
    %1431 = vmatpush.bf16.msra.mxu0 %v1420
    %1432 = vmatpush.bf16.msra.mxu0 %v1419
    %1433 = vmatpush.bf16.msra.mxu0 %v1418
    %1434 = vmatpush.bf16.msra.mxu0 %v1417
    %1435 = vmatpush.bf16.msra.mxu0 %v1416
    %1436 = vmatpush.bf16.msra.mxu0 %v1415
    %1437 = vmatpush.bf16.msra.mxu0 %v1414
    %1438 = vmatmul.bf16.gmra.mxu0 %v1359
    %v1439 = vpop.f32.mrf.mxu0
    %v1440 = vadd.f32 %v1380, %v1439
    %v1441 = vpop.f32.mrf.mxu0
    %v1442 = vadd.f32 %v1380, %v1441
    %1443 = vdwg.mxu0
    %v1444 = vmax.f32 %v1440, 0.0
    %v1445 = vmax.f32 %v1442, 0.0
    %v1446 = vpack.c.bf16 %v1445, %v1444
    %1447 = vmatpush.bf16.msra.mxu0 0
    %1448 = vmatpush.bf16.msra.mxu0 0
    %1449 = vmatpush.bf16.msra.mxu0 0
    %1450 = vmatpush.bf16.msra.mxu0 0
    %1451 = vmatpush.bf16.msra.mxu0 0
    %1452 = vmatpush.bf16.msra.mxu0 0
    %1453 = vmatpush.bf16.msra.mxu0 0
    %1454 = vmatpush.bf16.msra.mxu0 %v1446
    %1455 = vmatmul.bf16.gmra.mxu0 %v155
    %v1456 = vpop.f32.mrf.mxu0
    %v1457 = vadd.f32 0.0, %v1456
    %v1458 = vpop.f32.mrf.mxu0
    %v1459 = vadd.f32 0.0, %v1458
    %1460 = vmatmul.bf16.gmra.mxu0 %v158
    %v1461 = vpop.f32.mrf.mxu0
    %v1462 = vadd.f32 0.0, %v1461
    %v1463 = vpop.f32.mrf.mxu0
    %1464 = vdwg.mxu0
    %v1465 = vmul.f32 %v1457, %v178
    %v1466 = vmul.f32 %v1459, %v178
    %v1467 = vmul.f32 %v1462, %v178
    %s1468 = sld [smem:[#allocation3 + $0x3]]
    %v1469 = vsub.f32 %v120, %v1465
    %v1470 = vsub.f32 %v125, %v1466
    %v1471 = vsub.f32 %v130, %v1467
    %v1472 = vstv %s1468
    %v1473 = vmul.f32 %v1472, %v1469
    %v1474 = vmul.f32 %v1472, %v1470
    %v1475 = vmul.f32 %v1472, %v1471
    %v1476 = vadd.f32 %v1234, %v1473
    %v1477 = vadd.f32 %v1235, %v1474
    %v1478 = vadd.f32 %v1236, %v1475
    %v1479 = vpack.c.bf16 %v1477, %v1476
    %v1480 = vpack.c.bf16 %v1478, %v1478
    %s1481 = scalar_lea.vmem %s6, 192
    %v1482 = vld [vmem:[%s1481] sm:$0xf]
    %v1483 = vld [vmem:[%s1481 + $0x4] sm:$0xf]
    %v1484 = vld [vmem:[%s1481 + $0x8] sm:$0xf]
    %v1485 = vld [vmem:[%s1481 + $0xc] sm:$0xf]
    %v1486 = vld [vmem:[%s1481 + $0x10] sm:$0xf]
    %v1487 = vld [vmem:[%s1481 + $0x14] sm:$0xf]
    %v1488 = vld [vmem:[%s1481 + $0x18] sm:$0xf]
    %v1489 = vld [vmem:[%s1481 + $0x1c] sm:$0xf]
    %v1490 = vld [vmem:[%s1481 + $0x20] sm:$0xf]
    %v1491 = vld [vmem:[%s1481 + $0x24] sm:$0xf]
    %v1492 = vld [vmem:[%s1481 + $0x28] sm:$0xf]
    %v1493 = vld [vmem:[%s1481 + $0x2c] sm:$0xf]
    %v1494 = vld [vmem:[%s1481 + $0x30] sm:$0xf]
    %v1495 = vld [vmem:[%s1481 + $0x34] sm:$0xf]
    %v1496 = vld [vmem:[%s1481 + $0x38] sm:$0xf]
    %v1497 = vld [vmem:[%s1481 + $0x3c] sm:$0xf]
    %s1498 = scalar_lea.vmem %s7, 3
    %v1499 = vld [vmem:[%s1498] sm:$0x1]
    %v1501 = vperm.slane %v1499, 0
    %v1519 = vunpack.c.l.b16 %v1482
    %v1520 = vunpack.c.l.b16 %v1483
    %v1521 = vunpack.c.l.b16 %v1484
    %v1522 = vunpack.c.l.b16 %v1485
    %v1523 = vunpack.c.l.b16 %v1486
    %v1524 = vunpack.c.l.b16 %v1487
    %v1525 = vunpack.c.l.b16 %v1488
    %v1526 = vunpack.c.l.b16 %v1489
    %v1527 = vunpack.c.l.b16 %v1490
    %v1528 = vunpack.c.l.b16 %v1491
    %v1529 = vunpack.c.l.b16 %v1492
    %v1530 = vunpack.c.l.b16 %v1493
    %v1531 = vunpack.c.l.b16 %v1494
    %v1532 = vunpack.c.l.b16 %v1495
    %v1533 = vunpack.c.l.b16 %v1496
    %v1534 = vunpack.c.l.b16 %v1497
    %v1535 = vpack.c.b16 %v1520, %v1519
    %v1536 = vpack.c.b16 %v1522, %v1521
    %v1537 = vpack.c.b16 %v1524, %v1523
    %v1538 = vpack.c.b16 %v1526, %v1525
    %v1539 = vpack.c.b16 %v1528, %v1527
    %v1540 = vpack.c.b16 %v1530, %v1529
    %v1541 = vpack.c.b16 %v1532, %v1531
    %v1542 = vpack.c.b16 %v1534, %v1533
    %1551 = vmatpush.bf16.msra.mxu0 %v1542
    %1552 = vmatpush.bf16.msra.mxu0 %v1541
    %1553 = vmatpush.bf16.msra.mxu0 %v1540
    %1554 = vmatpush.bf16.msra.mxu0 %v1539
    %1555 = vmatpush.bf16.msra.mxu0 %v1538
    %1556 = vmatpush.bf16.msra.mxu0 %v1537
    %1557 = vmatpush.bf16.msra.mxu0 %v1536
    %1558 = vmatpush.bf16.msra.mxu0 %v1535
    %1559 = vmatmul.bf16.gmra.mxu0 %v1479
    %v1560 = vpop.f32.mrf.mxu0
    %v1561 = vadd.f32 %v1501, %v1560
    %v1562 = vpop.f32.mrf.mxu0
    %v1563 = vadd.f32 %v1501, %v1562
    %1564 = vmatmul.bf16.gmra.mxu0 %v1480
    %v1565 = vpop.f32.mrf.mxu0
    %v1566 = vadd.f32 %v1501, %v1565
    %v1567 = vpop.f32.mrf.mxu0
    %1568 = vdwg.mxu0
    %v1569 = vmax.f32 %v1561, 0.0
    %v1570 = vmax.f32 %v1563, 0.0
    %v1571 = vmax.f32 %v1566, 0.0
    %v1572 = vpack.c.bf16 %v1570, %v1569
    %v1573 = vpack.c.bf16 %v1571, %v1571
    %s1574 = scalar_lea.vmem %s8, 192
    %v1575 = vld [vmem:[%s1574] sm:$0xf]
    %v1576 = vld [vmem:[%s1574 + $0x4] sm:$0xf]
    %v1577 = vld [vmem:[%s1574 + $0x8] sm:$0xf]
    %v1578 = vld [vmem:[%s1574 + $0xc] sm:$0xf]
    %v1579 = vld [vmem:[%s1574 + $0x10] sm:$0xf]
    %v1580 = vld [vmem:[%s1574 + $0x14] sm:$0xf]
    %v1581 = vld [vmem:[%s1574 + $0x18] sm:$0xf]
    %v1582 = vld [vmem:[%s1574 + $0x1c] sm:$0xf]
    %v1583 = vld [vmem:[%s1574 + $0x20] sm:$0xf]
    %v1584 = vld [vmem:[%s1574 + $0x24] sm:$0xf]
    %v1585 = vld [vmem:[%s1574 + $0x28] sm:$0xf]
    %v1586 = vld [vmem:[%s1574 + $0x2c] sm:$0xf]
    %v1587 = vld [vmem:[%s1574 + $0x30] sm:$0xf]
    %v1588 = vld [vmem:[%s1574 + $0x34] sm:$0xf]
    %v1589 = vld [vmem:[%s1574 + $0x38] sm:$0xf]
    %v1590 = vld [vmem:[%s1574 + $0x3c] sm:$0xf]
    %s1591 = scalar_lea.vmem %s9, 3
    %v1592 = vld [vmem:[%s1591] sm:$0x1]
    %v1594 = vperm.slane %v1592, 0
    %v1612 = vunpack.c.l.b16 %v1575
    %v1613 = vunpack.c.l.b16 %v1576
    %v1614 = vunpack.c.l.b16 %v1577
    %v1615 = vunpack.c.l.b16 %v1578
    %v1616 = vunpack.c.l.b16 %v1579
    %v1617 = vunpack.c.l.b16 %v1580
    %v1618 = vunpack.c.l.b16 %v1581
    %v1619 = vunpack.c.l.b16 %v1582
    %v1620 = vunpack.c.l.b16 %v1583
    %v1621 = vunpack.c.l.b16 %v1584
    %v1622 = vunpack.c.l.b16 %v1585
    %v1623 = vunpack.c.l.b16 %v1586
    %v1624 = vunpack.c.l.b16 %v1587
    %v1625 = vunpack.c.l.b16 %v1588
    %v1626 = vunpack.c.l.b16 %v1589
    %v1627 = vunpack.c.l.b16 %v1590
    %v1628 = vpack.c.b16 %v1613, %v1612
    %v1629 = vpack.c.b16 %v1615, %v1614
    %v1630 = vpack.c.b16 %v1617, %v1616
    %v1631 = vpack.c.b16 %v1619, %v1618
    %v1632 = vpack.c.b16 %v1621, %v1620
    %v1633 = vpack.c.b16 %v1623, %v1622
    %v1634 = vpack.c.b16 %v1625, %v1624
    %v1635 = vpack.c.b16 %v1627, %v1626
    %1644 = vmatpush.bf16.msra.mxu0 %v1635
    %1645 = vmatpush.bf16.msra.mxu0 %v1634
    %1646 = vmatpush.bf16.msra.mxu0 %v1633
    %1647 = vmatpush.bf16.msra.mxu0 %v1632
    %1648 = vmatpush.bf16.msra.mxu0 %v1631
    %1649 = vmatpush.bf16.msra.mxu0 %v1630
    %1650 = vmatpush.bf16.msra.mxu0 %v1629
    %1651 = vmatpush.bf16.msra.mxu0 %v1628
    %1652 = vmatmul.bf16.gmra.mxu0 %v1572
    %v1653 = vpop.f32.mrf.mxu0
    %v1654 = vadd.f32 %v1594, %v1653
    %v1655 = vpop.f32.mrf.mxu0
    %v1656 = vadd.f32 %v1594, %v1655
    %1657 = vmatmul.bf16.gmra.mxu0 %v1573
    %v1658 = vpop.f32.mrf.mxu0
    %v1659 = vadd.f32 %v1594, %v1658
    %v1660 = vpop.f32.mrf.mxu0
    %1661 = vdwg.mxu0
    %v1662 = vmax.f32 %v1654, 0.0
    %v1663 = vmax.f32 %v1656, 0.0
    %v1664 = vmax.f32 %v1659, 0.0
    %v1665 = vmul.f32 %v1662, 2.0
    %v1666 = vmul.f32 %v1663, 2.0
    %v1667 = vmul.f32 %v1664, 2.0
    %v1668 = vsub.f32 %v1665, %v1234
    %v1669 = vsub.f32 %v1666, %v1235
    %v1670 = vsub.f32 %v1667, %v1236
    %v1671 = vpack.c.bf16 %v1669, %v1668
    %v1672 = vpack.c.bf16 %v1670, %v1670
    %v1674 = vsel %vm392, %v1672, 0
    %1676 = vmatpush.bf16.msra.mxu0 0
    %1677 = vmatpush.bf16.msra.mxu0 0
    %1678 = vmatpush.bf16.msra.mxu0 0
    %1679 = vmatpush.bf16.msra.mxu0 0
    %1680 = vmatpush.bf16.msra.mxu0 0
    %1681 = vmatpush.bf16.msra.mxu0 0
    %1682 = vmatpush.bf16.msra.mxu0 %v1674
    %1683 = vmatpush.bf16.msra.mxu0 %v1671
    %1684 = vmatmul.bf16.gmra.mxu0 %v390
    %v1685 = vpop.f32.mrf.mxu0
    %v1686 = vadd.f32 0.0, %v1685
    %v1687 = vpop.f32.mrf.mxu0
    %v1688 = vadd.f32 0.0, %v1687
    %1689 = vdwg.mxu0
    %v1690 = vmul.f32 %v1686, %v178
    %v1691 = vmul.f32 %v1688, %v178
    %s1692 = sld [smem:[#allocation5 + $0x3]]
    %v1693 = vsub.f32 %v137, %v1690
    %v1694 = vsub.f32 %v142, %v1691
    %v1695 = vstv %s1692
    %v1696 = vmul.f32 %v1695, %v1693
    %v1697 = vmul.f32 %v1695, %v1694
    %v1698 = vsub.f32 %v1444, %v1696
    %v1699 = vsub.f32 %v1445, %v1697
    %v1700 = vpack.c.bf16 %v1699, %v1698
    %s1701 = scalar_lea.vmem %s10, 192
    %v1702 = vld [vmem:[%s1701] sm:$0xf]
    %v1703 = vld [vmem:[%s1701 + $0x4] sm:$0xf]
    %v1704 = vld [vmem:[%s1701 + $0x8] sm:$0xf]
    %v1705 = vld [vmem:[%s1701 + $0xc] sm:$0xf]
    %v1706 = vld [vmem:[%s1701 + $0x10] sm:$0xf]
    %v1707 = vld [vmem:[%s1701 + $0x14] sm:$0xf]
    %v1708 = vld [vmem:[%s1701 + $0x18] sm:$0xf]
    %v1709 = vld [vmem:[%s1701 + $0x1c] sm:$0xf]
    %v1710 = vld [vmem:[%s1701 + $0x20] sm:$0xf]
    %v1711 = vld [vmem:[%s1701 + $0x24] sm:$0xf]
    %v1712 = vld [vmem:[%s1701 + $0x28] sm:$0xf]
    %v1713 = vld [vmem:[%s1701 + $0x2c] sm:$0xf]
    %v1714 = vld [vmem:[%s1701 + $0x30] sm:$0xf]
    %v1715 = vld [vmem:[%s1701 + $0x34] sm:$0xf]
    %v1716 = vld [vmem:[%s1701 + $0x38] sm:$0xf]
    %v1717 = vld [vmem:[%s1701 + $0x3c] sm:$0xf]
    %s1718 = scalar_lea.vmem %s11, 3
    %v1719 = vld [vmem:[%s1718] sm:$0x1]
    %v1721 = vperm.slane %v1719, 0
    %v1739 = vunpack.c.l.b16 %v1702
    %v1740 = vunpack.c.l.b16 %v1703
    %v1741 = vunpack.c.l.b16 %v1704
    %v1742 = vunpack.c.l.b16 %v1705
    %v1743 = vunpack.c.l.b16 %v1706
    %v1744 = vunpack.c.l.b16 %v1707
    %v1745 = vunpack.c.l.b16 %v1708
    %v1746 = vunpack.c.l.b16 %v1709
    %v1747 = vunpack.c.l.b16 %v1710
    %v1748 = vunpack.c.l.b16 %v1711
    %v1749 = vunpack.c.l.b16 %v1712
    %v1750 = vunpack.c.l.b16 %v1713
    %v1751 = vunpack.c.l.b16 %v1714
    %v1752 = vunpack.c.l.b16 %v1715
    %v1753 = vunpack.c.l.b16 %v1716
    %v1754 = vunpack.c.l.b16 %v1717
    %v1755 = vpack.c.b16 %v1740, %v1739
    %v1756 = vpack.c.b16 %v1742, %v1741
    %v1757 = vpack.c.b16 %v1744, %v1743
    %v1758 = vpack.c.b16 %v1746, %v1745
    %v1759 = vpack.c.b16 %v1748, %v1747
    %v1760 = vpack.c.b16 %v1750, %v1749
    %v1761 = vpack.c.b16 %v1752, %v1751
    %v1762 = vpack.c.b16 %v1754, %v1753
    %1771 = vmatpush.bf16.msra.mxu0 %v1762
    %1772 = vmatpush.bf16.msra.mxu0 %v1761
    %1773 = vmatpush.bf16.msra.mxu0 %v1760
    %1774 = vmatpush.bf16.msra.mxu0 %v1759
    %1775 = vmatpush.bf16.msra.mxu0 %v1758
    %1776 = vmatpush.bf16.msra.mxu0 %v1757
    %1777 = vmatpush.bf16.msra.mxu0 %v1756
    %1778 = vmatpush.bf16.msra.mxu0 %v1755
    %1779 = vmatmul.bf16.gmra.mxu0 %v1700
    %v1780 = vpop.f32.mrf.mxu0
    %v1781 = vadd.f32 %v1721, %v1780
    %v1782 = vpop.f32.mrf.mxu0
    %v1783 = vadd.f32 %v1721, %v1782
    %1784 = vdwg.mxu0
    %v1785 = vmax.f32 %v1781, 0.0
    %v1786 = vmax.f32 %v1783, 0.0
    %v1787 = vpack.c.bf16 %v1786, %v1785
    %s1788 = scalar_lea.vmem %s12, 192
    %v1789 = vld [vmem:[%s1788] sm:$0xf]
    %v1790 = vld [vmem:[%s1788 + $0x4] sm:$0xf]
    %v1791 = vld [vmem:[%s1788 + $0x8] sm:$0xf]
    %v1792 = vld [vmem:[%s1788 + $0xc] sm:$0xf]
    %v1793 = vld [vmem:[%s1788 + $0x10] sm:$0xf]
    %v1794 = vld [vmem:[%s1788 + $0x14] sm:$0xf]
    %v1795 = vld [vmem:[%s1788 + $0x18] sm:$0xf]
    %v1796 = vld [vmem:[%s1788 + $0x1c] sm:$0xf]
    %v1797 = vld [vmem:[%s1788 + $0x20] sm:$0xf]
    %v1798 = vld [vmem:[%s1788 + $0x24] sm:$0xf]
    %v1799 = vld [vmem:[%s1788 + $0x28] sm:$0xf]
    %v1800 = vld [vmem:[%s1788 + $0x2c] sm:$0xf]
    %v1801 = vld [vmem:[%s1788 + $0x30] sm:$0xf]
    %v1802 = vld [vmem:[%s1788 + $0x34] sm:$0xf]
    %v1803 = vld [vmem:[%s1788 + $0x38] sm:$0xf]
    %v1804 = vld [vmem:[%s1788 + $0x3c] sm:$0xf]
    %s1805 = scalar_lea.vmem %s13, 3
    %v1806 = vld [vmem:[%s1805] sm:$0x1]
    %v1808 = vperm.slane %v1806, 0
    %v1826 = vunpack.c.l.b16 %v1789
    %v1827 = vunpack.c.l.b16 %v1790
    %v1828 = vunpack.c.l.b16 %v1791
    %v1829 = vunpack.c.l.b16 %v1792
    %v1830 = vunpack.c.l.b16 %v1793
    %v1831 = vunpack.c.l.b16 %v1794
    %v1832 = vunpack.c.l.b16 %v1795
    %v1833 = vunpack.c.l.b16 %v1796
    %v1834 = vunpack.c.l.b16 %v1797
    %v1835 = vunpack.c.l.b16 %v1798
    %v1836 = vunpack.c.l.b16 %v1799
    %v1837 = vunpack.c.l.b16 %v1800
    %v1838 = vunpack.c.l.b16 %v1801
    %v1839 = vunpack.c.l.b16 %v1802
    %v1840 = vunpack.c.l.b16 %v1803
    %v1841 = vunpack.c.l.b16 %v1804
    %v1842 = vpack.c.b16 %v1827, %v1826
    %v1843 = vpack.c.b16 %v1829, %v1828
    %v1844 = vpack.c.b16 %v1831, %v1830
    %v1845 = vpack.c.b16 %v1833, %v1832
    %v1846 = vpack.c.b16 %v1835, %v1834
    %v1847 = vpack.c.b16 %v1837, %v1836
    %v1848 = vpack.c.b16 %v1839, %v1838
    %v1849 = vpack.c.b16 %v1841, %v1840
    %1858 = vmatpush.bf16.msra.mxu0 %v1849
    %1859 = vmatpush.bf16.msra.mxu0 %v1848
    %1860 = vmatpush.bf16.msra.mxu0 %v1847
    %1861 = vmatpush.bf16.msra.mxu0 %v1846
    %1862 = vmatpush.bf16.msra.mxu0 %v1845
    %1863 = vmatpush.bf16.msra.mxu0 %v1844
    %1864 = vmatpush.bf16.msra.mxu0 %v1843
    %1865 = vmatpush.bf16.msra.mxu0 %v1842
    %1866 = vmatmul.bf16.gmra.mxu0 %v1787
    %v1867 = vpop.f32.mrf.mxu0
    %v1868 = vadd.f32 %v1808, %v1867
    %v1869 = vpop.f32.mrf.mxu0
    %v1870 = vadd.f32 %v1808, %v1869
    %1871 = vdwg.mxu0
    %v1872 = vmax.f32 %v1868, 0.0
    %v1873 = vmax.f32 %v1870, 0.0
    %v1874 = vpack.c.bf16 %v1663, %v1662
    %v1875 = vpack.c.bf16 %v1664, %v1664
    %v1876 = vld [vmem:[%s14] sm:$0xf]
    %v1877 = vld [vmem:[%s14 + $0x4] sm:$0xf]
    %v1878 = vld [vmem:[%s14 + $0x8] sm:$0xf]
    %v1879 = vld [vmem:[%s14 + $0xc] sm:$0xf]
    %v1880 = vld [vmem:[%s14 + $0x10] sm:$0xf]
    %v1881 = vld [vmem:[%s14 + $0x14] sm:$0xf]
    %v1882 = vld [vmem:[%s14 + $0x18] sm:$0xf]
    %v1883 = vld [vmem:[%s14 + $0x1c] sm:$0xf]
    %v1884 = vld [vmem:[%s14 + $0x20] sm:$0xf]
    %v1885 = vld [vmem:[%s14 + $0x24] sm:$0xf]
    %v1886 = vld [vmem:[%s14 + $0x28] sm:$0xf]
    %v1887 = vld [vmem:[%s14 + $0x2c] sm:$0xf]
    %v1888 = vld [vmem:[%s14 + $0x30] sm:$0xf]
    %v1889 = vld [vmem:[%s14 + $0x34] sm:$0xf]
    %v1890 = vld [vmem:[%s14 + $0x38] sm:$0xf]
    %v1891 = vld [vmem:[%s14 + $0x3c] sm:$0xf]
    %v1892 = vld [vmem:[%s15] sm:$0x1]
    %v1894 = vperm.slane %v1892, 0
    %v1912 = vunpack.c.l.b16 %v1876
    %v1913 = vunpack.c.l.b16 %v1877
    %v1914 = vunpack.c.l.b16 %v1878
    %v1915 = vunpack.c.l.b16 %v1879
    %v1916 = vunpack.c.l.b16 %v1880
    %v1917 = vunpack.c.l.b16 %v1881
    %v1918 = vunpack.c.l.b16 %v1882
    %v1919 = vunpack.c.l.b16 %v1883
    %v1920 = vunpack.c.l.b16 %v1884
    %v1921 = vunpack.c.l.b16 %v1885
    %v1922 = vunpack.c.l.b16 %v1886
    %v1923 = vunpack.c.l.b16 %v1887
    %v1924 = vunpack.c.l.b16 %v1888
    %v1925 = vunpack.c.l.b16 %v1889
    %v1926 = vunpack.c.l.b16 %v1890
    %v1927 = vunpack.c.l.b16 %v1891
    %v1928 = vpack.c.b16 %v1913, %v1912
    %v1929 = vpack.c.b16 %v1915, %v1914
    %v1930 = vpack.c.b16 %v1917, %v1916
    %v1931 = vpack.c.b16 %v1919, %v1918
    %v1932 = vpack.c.b16 %v1921, %v1920
    %v1933 = vpack.c.b16 %v1923, %v1922
    %v1934 = vpack.c.b16 %v1925, %v1924
    %v1935 = vpack.c.b16 %v1927, %v1926
    %1944 = vmatpush.bf16.msra.mxu0 %v1935
    %1945 = vmatpush.bf16.msra.mxu0 %v1934
    %1946 = vmatpush.bf16.msra.mxu0 %v1933
    %1947 = vmatpush.bf16.msra.mxu0 %v1932
    %1948 = vmatpush.bf16.msra.mxu0 %v1931
    %1949 = vmatpush.bf16.msra.mxu0 %v1930
    %1950 = vmatpush.bf16.msra.mxu0 %v1929
    %1951 = vmatpush.bf16.msra.mxu0 %v1928
    %1952 = vmatmul.bf16.gmra.mxu0 %v1874
    %v1953 = vpop.f32.mrf.mxu0
    %v1954 = vadd.f32 %v1894, %v1953
    %v1955 = vpop.f32.mrf.mxu0
    %v1956 = vadd.f32 %v1894, %v1955
    %1957 = vmatmul.bf16.gmra.mxu0 %v1875
    %v1958 = vpop.f32.mrf.mxu0
    %v1959 = vadd.f32 %v1894, %v1958
    %v1960 = vpop.f32.mrf.mxu0
    %1961 = vdwg.mxu0
    %v1962 = vmax.f32 %v1954, 0.0
    %v1963 = vmax.f32 %v1956, 0.0
    %v1964 = vmax.f32 %v1959, 0.0
    %v1965 = vld [vmem:[%s16] sm:$0xf]
    %v1966 = vpack.c.bf16 %v1963, %v1962
    %v1967 = vpack.c.bf16 %v1964, %v1964
    %1968 = vmatpush.bf16.xpose.msra.mxu0 0
    %1969 = vmatpush.bf16.xpose.msra.mxu0 0
    %1970 = vmatpush.bf16.xpose.msra.mxu0 0
    %1971 = vmatpush.bf16.xpose.msra.mxu0 0
    %1972 = vmatpush.bf16.xpose.msra.mxu0 0
    %1973 = vmatpush.bf16.xpose.msra.mxu0 0
    %1974 = vmatpush.bf16.xpose.msra.mxu0 %v1967
    %1975 = vmatpush.bf16.xpose.msra.mxu0 %v1966
    %1976 = vmatmul.bf16.gmra.mxu0 %v1965
    %v1977 = vpop.f32.mrf.mxu0
    %v1978 = vadd.f32 0.0, %v1977
    %v1979 = vpop.f32.mrf.mxu0
    %1980 = vdwg.mxu0
    %1981 = vst.msk [vmem:[%s23] sm:$0xff] %vm388, %v1978
    %v1982 = vpack.c.bf16 %v1873, %v1872
    %v1983 = vld [vmem:[%s17] sm:$0xf]
    %v1984 = vld [vmem:[%s17 + $0x4] sm:$0xf]
    %v1985 = vld [vmem:[%s17 + $0x8] sm:$0xf]
    %v1986 = vld [vmem:[%s17 + $0xc] sm:$0xf]
    %v1987 = vld [vmem:[%s17 + $0x10] sm:$0xf]
    %v1988 = vld [vmem:[%s17 + $0x14] sm:$0xf]
    %v1989 = vld [vmem:[%s17 + $0x18] sm:$0xf]
    %v1990 = vld [vmem:[%s17 + $0x1c] sm:$0xf]
    %v1991 = vld [vmem:[%s17 + $0x20] sm:$0xf]
    %v1992 = vld [vmem:[%s17 + $0x24] sm:$0xf]
    %v1993 = vld [vmem:[%s17 + $0x28] sm:$0xf]
    %v1994 = vld [vmem:[%s17 + $0x2c] sm:$0xf]
    %v1995 = vld [vmem:[%s17 + $0x30] sm:$0xf]
    %v1996 = vld [vmem:[%s17 + $0x34] sm:$0xf]
    %v1997 = vld [vmem:[%s17 + $0x38] sm:$0xf]
    %v1998 = vld [vmem:[%s17 + $0x3c] sm:$0xf]
    %v1999 = vld [vmem:[%s18] sm:$0x1]
    %v2001 = vperm.slane %v1999, 0
    %v2019 = vunpack.c.l.b16 %v1983
    %v2020 = vunpack.c.l.b16 %v1984
    %v2021 = vunpack.c.l.b16 %v1985
    %v2022 = vunpack.c.l.b16 %v1986
    %v2023 = vunpack.c.l.b16 %v1987
    %v2024 = vunpack.c.l.b16 %v1988
    %v2025 = vunpack.c.l.b16 %v1989
    %v2026 = vunpack.c.l.b16 %v1990
    %v2027 = vunpack.c.l.b16 %v1991
    %v2028 = vunpack.c.l.b16 %v1992
    %v2029 = vunpack.c.l.b16 %v1993
    %v2030 = vunpack.c.l.b16 %v1994
    %v2031 = vunpack.c.l.b16 %v1995
    %v2032 = vunpack.c.l.b16 %v1996
    %v2033 = vunpack.c.l.b16 %v1997
    %v2034 = vunpack.c.l.b16 %v1998
    %v2035 = vpack.c.b16 %v2020, %v2019
    %v2036 = vpack.c.b16 %v2022, %v2021
    %v2037 = vpack.c.b16 %v2024, %v2023
    %v2038 = vpack.c.b16 %v2026, %v2025
    %v2039 = vpack.c.b16 %v2028, %v2027
    %v2040 = vpack.c.b16 %v2030, %v2029
    %v2041 = vpack.c.b16 %v2032, %v2031
    %v2042 = vpack.c.b16 %v2034, %v2033
    %2051 = vmatpush.bf16.msra.mxu0 %v2042
    %2052 = vmatpush.bf16.msra.mxu0 %v2041
    %2053 = vmatpush.bf16.msra.mxu0 %v2040
    %2054 = vmatpush.bf16.msra.mxu0 %v2039
    %2055 = vmatpush.bf16.msra.mxu0 %v2038
    %2056 = vmatpush.bf16.msra.mxu0 %v2037
    %2057 = vmatpush.bf16.msra.mxu0 %v2036
    %2058 = vmatpush.bf16.msra.mxu0 %v2035
    %2059 = vmatmul.bf16.gmra.mxu0 %v1982
    %v2060 = vpop.f32.mrf.mxu0
    %v2061 = vadd.f32 %v2001, %v2060
    %v2062 = vpop.f32.mrf.mxu0
    %v2063 = vadd.f32 %v2001, %v2062
    %2064 = vdwg.mxu0
    %v2065 = vmax.f32 %v2061, 0.0
    %v2066 = vmax.f32 %v2063, 0.0
    %v2067 = vld [vmem:[%s19] sm:$0xf]
    %v2068 = vpack.c.bf16 %v2066, %v2065
    %2069 = vmatpush.bf16.xpose.msra.mxu0 0
    %2070 = vmatpush.bf16.xpose.msra.mxu0 0
    %2071 = vmatpush.bf16.xpose.msra.mxu0 0
    %2072 = vmatpush.bf16.xpose.msra.mxu0 0
    %2073 = vmatpush.bf16.xpose.msra.mxu0 0
    %2074 = vmatpush.bf16.xpose.msra.mxu0 0
    %2075 = vmatpush.bf16.xpose.msra.mxu0 0
    %2076 = vmatpush.bf16.xpose.msra.mxu0 %v2068
    %2077 = vmatmul.bf16.gmra.mxu0 %v2067
    %v2078 = vpop.f32.mrf.mxu0
    %v2079 = vadd.f32 0.0, %v2078
    %v2080 = vpop.f32.mrf.mxu0
    %2081 = vdwg.mxu0
    %2082 = vst.msk [vmem:[%s24] sm:$0xff] %vm153, %v2079
    // Predicated region
    $region102: #{gcn_policy_forward.1} parent=1 // pred_check
      _
    $region103: #{gcn_policy_forward.1} parent=1 // pred_check_branch
      %2084 = sbr.rel (0) target = $region105
    $region104: #{gcn_policy_forward.1} parent=1 // pred_region
      _
    $region105: #{gcn_policy_forward.1} parent=1 // pred_fallthru
      _
    // Predicated region
    $region106: #{gcn_policy_forward.1} parent=1 // pred_check
      _
    $region107: #{gcn_policy_forward.1} parent=1 // pred_check_branch
      %2086 = sbr.rel (0) target = $region109
    $region108: #{gcn_policy_forward.1} parent=1 // pred_region
      _
    $region109: #{gcn_policy_forward.1} parent=1 // pred_fallthru
      _
    // Predicated region
    $region110: #{gcn_policy_forward.1} parent=1 // pred_check
      _
    $region111: #{gcn_policy_forward.1} parent=1 // pred_check_branch
      %2088 = sbr.rel (0) target = $region113
    $region112: #{gcn_policy_forward.1} parent=1 // pred_region
      _
    $region113: #{gcn_policy_forward.1} parent=1 // pred_fallthru
      _
    // Predicated region
    $region114: #{gcn_policy_forward.1} parent=1 // pred_check
      _
    $region115: #{gcn_policy_forward.1} parent=1 // pred_check_branch
      %2090 = sbr.rel (0) target = $region117
    $region116: #{gcn_policy_forward.1} parent=1 // pred_region
      _
    $region117: #{gcn_policy_forward.1} parent=1 // pred_fallthru
      _
    %2091 = vsyncpa [#allocation4], 1
    %2092 = vsyncpa [#allocation6], 1

</llo_original>
